<compile_context>
chip_gen: v7x
topology: tpu7x:2x2x1
jax: 0.10.0
libtpu: 0.0.40
codegen_flags: <defaults>
</compile_context>

<pallas_src>
import functools

import jax
import jax.numpy as jnp
from jax.experimental import pallas as pl
from jax.experimental.pallas import tpu as pltpu


def _int_pow(x, n):
    """x**n for a small static positive integer n via repeated multiplies (VPU only)."""
    result = None
    base = x
    while True:
        if n & 1:
            result = base if result is None else result * base
        n >>= 1
        if n == 0:
            return result
        base = base * base


def _gem_kernel(p_ref, m_ref, x_ref, o_ref, *, eps, p_int):
    # p_ref: SMEM (1,)       learnable GeM exponent (scalar prefetch)
    # m_ref: VMEM (K, Nout)  constant 1/(kh*kw)-weighted pooling/selection matrix
    # x_ref: VMEM (TR, K)    tile of input super-rows
    # o_ref: VMEM (TR, Nout) pooled output tile
    x = jnp.maximum(x_ref[...].astype(jnp.float32), eps)   # clamp(min=eps), eps > 0
    if p_int is not None:
        # Fast path: static small-integer exponent (default p=3) -> pure VPU
        # multiplies, no per-input-element transcendentals.
        xp = _int_pow(x, p_int)
        inv_p = jnp.float32(1.0 / p_int)
    else:
        p = p_ref[0].astype(jnp.float32)
        inv_p = 1.0 / p
        xp = jnp.exp(p * jnp.log(x))                        # x ** p  (x > 0)

    # 2x2 window mean + even/odd column gather in one small MXU matmul.
    pooled = jnp.dot(
        xp, m_ref[...],
        precision=jax.lax.Precision.HIGHEST,
        preferred_element_type=jnp.float32,
    )
    # pooled >= eps**p > 0, so the log is well defined.
    o_ref[...] = jnp.exp(inv_p * jnp.log(pooled)).astype(o_ref.dtype)


def gem_pallas(x, p, eps=1e-6, stride=(2, 2), *,
               block_bytes=2 * 1024 * 1024, lane_target=512):
    """GeM pooling. x: (N, C, H, W), p: scalar exponent (learnable)."""
    N, C, H, W = x.shape
    kh, kw = stride
    Hout, Wout = H // kh, W // kw
    # avg_pool2d drops the remainder; crop only when needed (no-op otherwise).
    if (H, W) != (Hout * kh, Wout * kw):
        x = x[:, :, :Hout * kh, :Wout * kw]

    Wc = Wout * kw                 # cropped width
    base_k = kh * Wc               # input elements feeding one pooled output row
    R = N * C * Hout               # number of pooled output rows

    # Group G output rows per kernel row so that both the input lane width
    # (G*base_k) and the output lane width (G*Wout) are dense. Pure reshapes only.
    G = 1
    for g in range(min(R, max(1, lane_target // base_k)), 0, -1):
        if R % g == 0:
            G = g
            break
    K = G * base_k                 # kernel input row length (lane dim)
    Nout = G * Wout                # kernel output row length (lane dim)
    Rg = R // G                    # number of kernel rows

    x2 = x.reshape(Rg, K)          # pure reshape: no HBM data movement

    # Block-diagonal pooling/selection matrix, mean weight folded in.
    i = jnp.arange(K)[:, None]
    j = jnp.arange(Nout)[None, :]
    same_group = (i // base_k) == (j // Wout)
    same_col = ((i % Wc) // kw) == (j % Wout)
    m = jnp.where(same_group & same_col, 1.0 / (kh * kw), 0.0).astype(jnp.float32)

    # Fast path when p is a concrete small integer (default p=3); traced /
    # non-integer p falls back to the general exp(p*log(x)) path.
    p_int = None
    try:
        pv = float(p)
        if pv == round(pv) and 1 <= int(round(pv)) <= 16:
            p_int = int(round(pv))
    except Exception:
        p_int = None

    p_arr = jnp.asarray(p, jnp.float32).reshape(1)

    # Row tile sized to ~block_bytes of input per grid step (multiple of 8).
    rows_per_block = max(8, (block_bytes // (K * x.dtype.itemsize)) // 8 * 8)
    TR = min(Rg, rows_per_block)
    grid = (pl.cdiv(Rg, TR),)

    kernel = functools.partial(_gem_kernel, eps=float(eps), p_int=p_int)

    out = pl.pallas_call(
        kernel,
        out_shape=jax.ShapeDtypeStruct((Rg, Nout), x.dtype),
        grid_spec=pltpu.PrefetchScalarGridSpec(
            num_scalar_prefetch=1,                 # p lands in SMEM
            grid=grid,
            in_specs=[
                # Pooling matrix: constant block index -> fetched once, resident.
                pl.BlockSpec((K, Nout), lambda i, p_ref: (0, 0)),
                # Input super-rows: streamed / double-buffered along the grid.
                pl.BlockSpec((TR, K), lambda i, p_ref: (i, 0)),
            ],
            out_specs=pl.BlockSpec((TR, Nout), lambda i, p_ref: (i, 0)),
        ),
        compiler_params=pltpu.CompilerParams(
            dimension_semantics=("parallel",),     # megacore sharding on v7x
            vmem_limit_bytes=32 * 1024 * 1024,     # safe on v5e/v6e/v7x
        ),
    )(p_arr, m, x2)

    return out.reshape(N, C, Hout, Wout)


def gem_reference(x, p, eps=1e-6, stride=(2, 2)):
    """Pure-JAX reference for validation."""
    N, C, H, W = x.shape
    kh, kw = stride
    Hout, Wout = H // kh, W // kw
    xc = jnp.maximum(x[:, :, :Hout * kh, :Wout * kw], eps) ** p
    xc = xc.reshape(N, C, Hout, kh, Wout, kw)
    pooled = xc.mean(axis=(3, 5))
    return pooled ** (1.0 / p)


if __name__ == "__main__":
    key = jax.random.PRNGKey(0)
    # NCHW, consistent with the module; even spatial dims.
    x = jax.random.uniform(key, (2, 4, 16, 16), dtype=jnp.float32)
    eps = 1e-6

    # Deterministic parameter init: nn.Parameter(torch.ones(1) * 3) -> p = 3.0
    p = jnp.float32(3.0)
    y = gem_pallas(x, p, eps=eps, stride=(2, 2))
    jax.block_until_ready(y)
    y_ref = gem_reference(x, p, eps=eps, stride=(2, 2))
    assert y.shape == (2, 4, 8, 8)
    assert jnp.allclose(y, y_ref, atol=1e-4, rtol=1e-4)

    # Non-integer p exercises the general exp/log path (learnable-p case).
    p2 = jnp.float32(2.5)
    y2 = gem_pallas(x, p2, eps=eps, stride=(2, 2))
    jax.block_until_ready(y2)
    y2_ref = gem_reference(x, p2, eps=eps, stride=(2, 2))
    assert jnp.allclose(y2, y2_ref, atol=1e-4, rtol=1e-4)

    print("KERNEL_OK")
</pallas_src>

<mosaic_0001>
module attributes {stable_mosaic.version = 11 : i64} {
  func.func @_gem_kernel(%arg0: i32, %arg1: memref<1xf32, #tpu.memory_space<smem>>, %arg2: memref<512x128xf32, #tpu.memory_space<vmem>>, %arg3: memref<4x512xf32, #tpu.memory_space<vmem>>, %arg4: memref<4x128xf32, #tpu.memory_space<vmem>>) attributes {dimension_semantics = [#tpu.dimension_semantics<parallel>], iteration_bounds = array<i64: 1>, scalar_prefetch = 1 : i64, scratch_operands = 0 : i64, tpu.core_type = #tpu.core_type<tc>, window_params = [{pipeline_mode = #tpu.pipeline_mode<synchronous>, transform_indices = @transform_0, window_bounds = array<i64: 512, 128>}, {transform_indices = @transform_1, window_bounds = array<i64: 4, 512>}, {transform_indices = @transform_2, window_bounds = array<i64: 4, 128>}]} {
    %c0 = arith.constant 0 : index
    %c0_0 = arith.constant 0 : index
    %0 = vector.load %arg3[%c0, %c0_0] : memref<4x512xf32, #tpu.memory_space<vmem>>, vector<4x512xf32>
    %cst = arith.constant 9.99999997E-7 : f32
    %1 = vector.broadcast %cst : f32 to vector<4x512xf32>
    %2 = arith.maximumf %0, %1 : vector<4x512xf32>
    %3 = arith.mulf %2, %2 : vector<4x512xf32>
    %4 = arith.mulf %2, %3 : vector<4x512xf32>
    %c0_1 = arith.constant 0 : index
    %c0_2 = arith.constant 0 : index
    %5 = vector.load %arg2[%c0_1, %c0_2] : memref<512x128xf32, #tpu.memory_space<vmem>>, vector<512x128xf32>
    %cst_3 = arith.constant dense<0.000000e+00> : vector<4x128xf32>
    %6 = tpu.matmul %4, %5, %cst_3 {dimension_numbers = #tpu.dot_dimension_numbers<[1], [0], [0], [1], [0, 0, 1, 1], [], []>, precision = #tpu.contract_precision<fp32>} : vector<4x512xf32>, vector<512x128xf32>, vector<4x128xf32> -> vector<4x128xf32>
    %7 = math.log %6 : vector<4x128xf32>
    %cst_4 = arith.constant 0.333333343 : f32
    %8 = vector.broadcast %cst_4 : f32 to vector<4x128xf32>
    %9 = arith.mulf %8, %7 : vector<4x128xf32>
    %10 = math.exp %9 : vector<4x128xf32>
    %c0_5 = arith.constant 0 : index
    %c0_6 = arith.constant 0 : index
    %11 = vector.load %arg4[%c0_5, %c0_6] : memref<4x128xf32, #tpu.memory_space<vmem>>, vector<4x128xf32>
    tpu.vector_store %arg4[%c0_5, %c0_6], %10 {strides = array<i32>} : memref<4x128xf32, #tpu.memory_space<vmem>>, vector<4x128xf32>,
    return
  }
  func.func @transform_0(%arg0: i32, %arg1: memref<1xf32, #tpu.memory_space<smem>>) -> (i32, i32) {
    %c0_i32 = arith.constant 0 : i32
    %c0_i32_0 = arith.constant 0 : i32
    %c0_i32_1 = arith.constant 0 : i32
    return %c0_i32, %c0_i32_0 : i32, i32
  }
  func.func @transform_1(%arg0: i32, %arg1: memref<1xf32, #tpu.memory_space<smem>>) -> (i32, i32) {
    %c0_i32 = arith.constant 0 : i32
    %c0_i32_0 = arith.constant 0 : i32
    return %arg0, %c0_i32 : i32, i32
  }
  func.func @transform_2(%arg0: i32, %arg1: memref<1xf32, #tpu.memory_space<smem>>) -> (i32, i32) {
    %c0_i32 = arith.constant 0 : i32
    %c0_i32_0 = arith.constant 0 : i32
    return %arg0, %c0_i32 : i32, i32
  }
}

</mosaic_0001>

<llo_original>
// kernel: tpu_custom_call.1
$region0: #{tpu_custom_call.1}
  #allocation0 [shape = 'u32[]', space=smem, size = 0x4, offset = 0x4, fixed_abs, tag = 'smem constant byte address 0x4 - core index']
  #allocation1 [shape = 'u32[144,128]{1,0:T(1,128)}', space=vmem, size = 0x12000, scoped, tag = 'internal scratch']
  #allocation2 [shape = 's32[1]{0}', space=sflag, size = 0x4, scoped, tag = 'scoped memory for tpu_custom_call.1']
  #allocation3 [shape = 'f32[1]{0:T(128)S(6)}', space=smem, size = 0x200, scoped, tag = 'prefetched SMEM operand 0']
  %s0 = inlined_call_operand.<no memory space> [shape: f32[1], index: 0, kind: input, shape index: {}]
  %s1 = inlined_call_operand.hbm [shape: f32[512,128], index: 1, kind: input, shape index: {}]
  %s2 = inlined_call_operand.hbm [shape: f32[4,512], index: 2, kind: input, shape index: {}]
  %s3 = inlined_call_operand.hbm [shape: f32[4,128], index: 3, kind: output, shape index: {}]
  %s4 = sld [smem:[#allocation0]]
  $region26: #{tpu_custom_call.1} parent=0
    _
  %s6 = ssub.s32 1, %s4
  %s7 = scalar_select 0, %s6, %s4
  %8 = sst [smem:[#allocation3]] %s0
  $region1: #{tpu_custom_call.1} parent=0
    #allocation4 [shape = 'u8[262144]{0}', space=vmem, size = 0x40000, scoped, tag = 'input window, operand 1, single buffered']
    #allocation5 [shape = 's32[1]{0}', space=sflag, size = 0x4, scoped, tag = 'scoped memory for tpu_custom_call.1']
    #allocation6 [shape = 's32[1]{0}', space=sflag, size = 0x4, scoped, tag = 'scoped memory for tpu_custom_call.1']
    #allocation7 [shape = 'u8[8192]{0}', space=vmem, size = 0x2000, scoped, tag = 'input window, operand 2, single buffered']
    #allocation8 [shape = 's32[1]{0}', space=sflag, size = 0x4, scoped, tag = 'scoped memory for tpu_custom_call.1']
    #allocation9 [shape = 'u8[2048]{0}', space=vmem, size = 0x800, scoped, tag = 'output window, operand 0, single buffered']
    %9 = vsyncpa [#allocation5], 0
    %10 = vsyncpa [#allocation8], 0
    %11 = vsyncpa [#allocation6], 0
    // Predicated region
    $region2: #{tpu_custom_call.1} parent=1 // pred_check
      _
    $region3: #{tpu_custom_call.1} parent=1 // pred_check_branch
      %13 = sbr.rel (0) target = $region5
    $region4: #{tpu_custom_call.1} parent=1 // pred_region
      %s15 = ssub.s32 8192, 8192
      %16 = vsyncadd [#allocation5], %s15
      %s17 = sshll.u32 [#allocation4], 4
      %s18 = int_to_ptr.vmem [resolvable:$true] %s17
      %23 = dma.hbm_to_vmem [thread:$0]  %s1, 8192, %s18, [#allocation5], 128, 128, 8
    $region5: #{tpu_custom_call.1} parent=1 // pred_fallthru
      _
    // Predicated region
    $region6: #{tpu_custom_call.1} parent=1 // pred_check
      _
    $region7: #{tpu_custom_call.1} parent=1 // pred_check_branch
      %25 = sbr.rel (0) target = $region9
    $region8: #{tpu_custom_call.1} parent=1 // pred_region
      %s27 = ssub.s32 256, 256
      %28 = vsyncadd [#allocation8], %s27
      %s30 = sshll.u32 [#allocation7], 4
      %s31 = int_to_ptr.vmem [resolvable:$true] %s30
      %33 = dma.hbm_to_vmem [thread:$0]  %s2, 256, %s31, [#allocation8]
    $region9: #{tpu_custom_call.1} parent=1 // pred_fallthru
      _
    // Predicated region
    $region10: #{tpu_custom_call.1} parent=1 // pred_check
      _
    $region11: #{tpu_custom_call.1} parent=1 // pred_check_branch
      %35 = sbr.rel (0) target = $region13
    $region12: #{tpu_custom_call.1} parent=1 // pred_region
      %36 = dma.done [#allocation5], 8192
    $region13: #{tpu_custom_call.1} parent=1 // pred_fallthru
      _
    // Predicated region
    $region14: #{tpu_custom_call.1} parent=1 // pred_check
      _
    $region15: #{tpu_custom_call.1} parent=1 // pred_check_branch
      %38 = sbr.rel (0) target = $region17
    $region16: #{tpu_custom_call.1} parent=1 // pred_region
      %39 = dma.done [#allocation8], 256
    $region17: #{tpu_custom_call.1} parent=1 // pred_fallthru
      _
    %v40 = vld [vmem:[#allocation7] sm:$0xff]
    %v41 = vld [vmem:[#allocation7 + $0x8] sm:$0xff]
    %v42 = vmax.f32 %v40, 1e-06
    %v43 = vmax.f32 %v41, 1e-06
    %v44 = vmul.f32 %v42, %v42
    %v45 = vmul.f32 %v43, %v43
    %v46 = vmul.f32 %v42, %v44
    %v47 = vmul.f32 %v43, %v45
    %v48 = vld [vmem:[#allocation4] sm:$0xff]
    %v49 = vld [vmem:[#allocation4 + $0x8] sm:$0xff]
    %v50 = vld [vmem:[#allocation4 + $0x10] sm:$0xff]
    %v51 = vld [vmem:[#allocation4 + $0x18] sm:$0xff]
    %v52 = vld [vmem:[#allocation4 + $0x20] sm:$0xff]
    %v53 = vld [vmem:[#allocation4 + $0x28] sm:$0xff]
    %v54 = vld [vmem:[#allocation4 + $0x30] sm:$0xff]
    %v55 = vld [vmem:[#allocation4 + $0x38] sm:$0xff]
    %v56 = vld [vmem:[#allocation4 + $0x40] sm:$0xff]
    %v57 = vld [vmem:[#allocation4 + $0x48] sm:$0xff]
    %v58 = vld [vmem:[#allocation4 + $0x50] sm:$0xff]
    %v59 = vld [vmem:[#allocation4 + $0x58] sm:$0xff]
    %v60 = vld [vmem:[#allocation4 + $0x60] sm:$0xff]
    %v61 = vld [vmem:[#allocation4 + $0x68] sm:$0xff]
    %v62 = vld [vmem:[#allocation4 + $0x70] sm:$0xff]
    %v63 = vld [vmem:[#allocation4 + $0x78] sm:$0xff]
    %v64 = vld [vmem:[#allocation4 + $0x80] sm:$0xff]
    %v65 = vld [vmem:[#allocation4 + $0x88] sm:$0xff]
    %v66 = vld [vmem:[#allocation4 + $0x90] sm:$0xff]
    %v67 = vld [vmem:[#allocation4 + $0x98] sm:$0xff]
    %v68 = vld [vmem:[#allocation4 + $0xa0] sm:$0xff]
    %v69 = vld [vmem:[#allocation4 + $0xa8] sm:$0xff]
    %v70 = vld [vmem:[#allocation4 + $0xb0] sm:$0xff]
    %v71 = vld [vmem:[#allocation4 + $0xb8] sm:$0xff]
    %v72 = vld [vmem:[#allocation4 + $0xc0] sm:$0xff]
    %v73 = vld [vmem:[#allocation4 + $0xc8] sm:$0xff]
    %v74 = vld [vmem:[#allocation4 + $0xd0] sm:$0xff]
    %v75 = vld [vmem:[#allocation4 + $0xd8] sm:$0xff]
    %v76 = vld [vmem:[#allocation4 + $0xe0] sm:$0xff]
    %v77 = vld [vmem:[#allocation4 + $0xe8] sm:$0xff]
    %v78 = vld [vmem:[#allocation4 + $0xf0] sm:$0xff]
    %v79 = vld [vmem:[#allocation4 + $0xf8] sm:$0xff]
    %v80 = vld [vmem:[#allocation4 + $0x100] sm:$0xff]
    %v81 = vld [vmem:[#allocation4 + $0x108] sm:$0xff]
    %v82 = vld [vmem:[#allocation4 + $0x110] sm:$0xff]
    %v83 = vld [vmem:[#allocation4 + $0x118] sm:$0xff]
    %v84 = vld [vmem:[#allocation4 + $0x120] sm:$0xff]
    %v85 = vld [vmem:[#allocation4 + $0x128] sm:$0xff]
    %v86 = vld [vmem:[#allocation4 + $0x130] sm:$0xff]
    %v87 = vld [vmem:[#allocation4 + $0x138] sm:$0xff]
    %v88 = vld [vmem:[#allocation4 + $0x140] sm:$0xff]
    %v89 = vld [vmem:[#allocation4 + $0x148] sm:$0xff]
    %v90 = vld [vmem:[#allocation4 + $0x150] sm:$0xff]
    %v91 = vld [vmem:[#allocation4 + $0x158] sm:$0xff]
    %v92 = vld [vmem:[#allocation4 + $0x160] sm:$0xff]
    %v93 = vld [vmem:[#allocation4 + $0x168] sm:$0xff]
    %v94 = vld [vmem:[#allocation4 + $0x170] sm:$0xff]
    %v95 = vld [vmem:[#allocation4 + $0x178] sm:$0xff]
    %v96 = vld [vmem:[#allocation4 + $0x180] sm:$0xff]
    %v97 = vld [vmem:[#allocation4 + $0x188] sm:$0xff]
    %v98 = vld [vmem:[#allocation4 + $0x190] sm:$0xff]
    %v99 = vld [vmem:[#allocation4 + $0x198] sm:$0xff]
    %v100 = vld [vmem:[#allocation4 + $0x1a0] sm:$0xff]
    %v101 = vld [vmem:[#allocation4 + $0x1a8] sm:$0xff]
    %v102 = vld [vmem:[#allocation4 + $0x1b0] sm:$0xff]
    %v103 = vld [vmem:[#allocation4 + $0x1b8] sm:$0xff]
    %v104 = vld [vmem:[#allocation4 + $0x1c0] sm:$0xff]
    %v105 = vld [vmem:[#allocation4 + $0x1c8] sm:$0xff]
    %v106 = vld [vmem:[#allocation4 + $0x1d0] sm:$0xff]
    %v107 = vld [vmem:[#allocation4 + $0x1d8] sm:$0xff]
    %v108 = vld [vmem:[#allocation4 + $0x1e0] sm:$0xff]
    %v109 = vld [vmem:[#allocation4 + $0x1e8] sm:$0xff]
    %v110 = vld [vmem:[#allocation4 + $0x1f0] sm:$0xff]
    %v111 = vld [vmem:[#allocation4 + $0x1f8] sm:$0xff]
    %v114 = vcombine.high %v46, %v46
    %v115 = vcombine.high %v47, %v47
    %118 = vmatprep.subr.mxu0 0.0
    %v119 = vand.u32 %v48, 4294901760
    %120 = vmatpush1.msra.mxu0 %v119
    %121 = vmatprep.subr.mxu0 0.0
    %v122 = vand.u32 %v49, 4294901760
    %123 = vmatpush1.msra.mxu0 %v122
    %124 = vmatprep.subr.mxu0 0.0
    %v125 = vand.u32 %v50, 4294901760
    %126 = vmatpush1.msra.mxu0 %v125
    %127 = vmatprep.subr.mxu0 0.0
    %v128 = vand.u32 %v51, 4294901760
    %129 = vmatpush1.msra.mxu0 %v128
    %130 = vmatprep.subr.mxu0 0.0
    %v131 = vand.u32 %v52, 4294901760
    %132 = vmatpush1.msra.mxu0 %v131
    %133 = vmatprep.subr.mxu0 0.0
    %v134 = vand.u32 %v53, 4294901760
    %135 = vmatpush1.msra.mxu0 %v134
    %136 = vmatprep.subr.mxu0 0.0
    %v137 = vand.u32 %v54, 4294901760
    %138 = vmatpush1.msra.mxu0 %v137
    %139 = vmatprep.subr.mxu0 0.0
    %v140 = vand.u32 %v55, 4294901760
    %141 = vmatpush1.msra.mxu0 %v140
    %142 = vmatprep.subr.mxu0 0.0
    %v143 = vand.u32 %v56, 4294901760
    %144 = vmatpush1.msra.mxu0 %v143
    %145 = vmatprep.subr.mxu0 0.0
    %v146 = vand.u32 %v57, 4294901760
    %147 = vmatpush1.msra.mxu0 %v146
    %148 = vmatprep.subr.mxu0 0.0
    %v149 = vand.u32 %v58, 4294901760
    %150 = vmatpush1.msra.mxu0 %v149
    %151 = vmatprep.subr.mxu0 0.0
    %v152 = vand.u32 %v59, 4294901760
    %153 = vmatpush1.msra.mxu0 %v152
    %154 = vmatprep.subr.mxu0 0.0
    %v155 = vand.u32 %v60, 4294901760
    %156 = vmatpush1.msra.mxu0 %v155
    %157 = vmatprep.subr.mxu0 0.0
    %v158 = vand.u32 %v61, 4294901760
    %159 = vmatpush1.msra.mxu0 %v158
    %160 = vmatprep.subr.mxu0 0.0
    %v161 = vand.u32 %v62, 4294901760
    %162 = vmatpush1.msra.mxu0 %v161
    %163 = vmatprep.subr.mxu0 0.0
    %v164 = vand.u32 %v63, 4294901760
    %165 = vmatpush1.msra.mxu0 %v164
    %166 = vmatprep.subr.mxu0 0.0
    %v167 = vand.u32 %v64, 4294901760
    %168 = vmatpush1.msra.mxu0 %v167
    %169 = vmatprep.subr.mxu0 0.0
    %v170 = vand.u32 %v65, 4294901760
    %171 = vmatpush1.msra.mxu0 %v170
    %172 = vmatprep.subr.mxu0 0.0
    %v173 = vand.u32 %v66, 4294901760
    %174 = vmatpush1.msra.mxu0 %v173
    %175 = vmatprep.subr.mxu0 0.0
    %v176 = vand.u32 %v67, 4294901760
    %177 = vmatpush1.msra.mxu0 %v176
    %178 = vmatprep.subr.mxu0 0.0
    %v179 = vand.u32 %v68, 4294901760
    %180 = vmatpush1.msra.mxu0 %v179
    %181 = vmatprep.subr.mxu0 0.0
    %v182 = vand.u32 %v69, 4294901760
    %183 = vmatpush1.msra.mxu0 %v182
    %184 = vmatprep.subr.mxu0 0.0
    %v185 = vand.u32 %v70, 4294901760
    %186 = vmatpush1.msra.mxu0 %v185
    %187 = vmatprep.subr.mxu0 0.0
    %v188 = vand.u32 %v71, 4294901760
    %189 = vmatpush1.msra.mxu0 %v188
    %190 = vmatprep.subr.mxu0 0.0
    %v191 = vand.u32 %v72, 4294901760
    %192 = vmatpush1.msra.mxu0 %v191
    %193 = vmatprep.subr.mxu0 0.0
    %v194 = vand.u32 %v73, 4294901760
    %195 = vmatpush1.msra.mxu0 %v194
    %196 = vmatprep.subr.mxu0 0.0
    %v197 = vand.u32 %v74, 4294901760
    %198 = vmatpush1.msra.mxu0 %v197
    %199 = vmatprep.subr.mxu0 0.0
    %v200 = vand.u32 %v75, 4294901760
    %201 = vmatpush1.msra.mxu0 %v200
    %202 = vmatprep.subr.mxu0 0.0
    %v203 = vand.u32 %v76, 4294901760
    %204 = vmatpush1.msra.mxu0 %v203
    %205 = vmatprep.subr.mxu0 0.0
    %v206 = vand.u32 %v77, 4294901760
    %207 = vmatpush1.msra.mxu0 %v206
    %208 = vmatprep.subr.mxu0 0.0
    %v209 = vand.u32 %v78, 4294901760
    %210 = vmatpush1.msra.mxu0 %v209
    %211 = vmatprep.subr.mxu0 0.0
    %v212 = vand.u32 %v79, 4294901760
    %213 = vmatpush1.msra.mxu0 %v212
    %v214 = vand.u32 %v114, 4294901760
    %v215 = vsub.f32 %v114, %v214
    %v216 = vand.u32 %v215, 4294901760
    %v217 = vsub.f32 %v215, %v216
    %v218 = vand.u32 %v217, 4294901760
    %219 = vmatprep.mubr.f32.mxu0 %v218
    %v220 = vand.u32 %v46, 4294901760
    %v221 = vsub.f32 %v46, %v220
    %v222 = vand.u32 %v221, 4294901760
    %v223 = vsub.f32 %v221, %v222
    %v224 = vand.u32 %v223, 4294901760
    %225 = vmatmul.mubr.f32.gmra.mrb[0].mxu0 %v224
    %v226 = vpop.f32.mrb[0].mxu0
    %v227 = vadd.f32 0.0, %v226
    %v228 = vpop.f32.mrb[0].mxu0
    %229 = vdwg.mxu0
    %230 = vmatprep.subr.mxu0 0.0
    %v231 = vand.u32 %v48, 4294901760
    %v232 = vsub.f32 %v48, %v231
    %v233 = vand.u32 %v232, 4294901760
    %v234 = vsub.f32 %v232, %v233
    %v235 = vand.u32 %v234, 4294901760
    %236 = vmatpush1.msra.mxu0 %v235
    %237 = vmatprep.subr.mxu0 0.0
    %v238 = vand.u32 %v49, 4294901760
    %v239 = vsub.f32 %v49, %v238
    %v240 = vand.u32 %v239, 4294901760
    %v241 = vsub.f32 %v239, %v240
    %v242 = vand.u32 %v241, 4294901760
    %243 = vmatpush1.msra.mxu0 %v242
    %244 = vmatprep.subr.mxu0 0.0
    %v245 = vand.u32 %v50, 4294901760
    %v246 = vsub.f32 %v50, %v245
    %v247 = vand.u32 %v246, 4294901760
    %v248 = vsub.f32 %v246, %v247
    %v249 = vand.u32 %v248, 4294901760
    %250 = vmatpush1.msra.mxu0 %v249
    %251 = vmatprep.subr.mxu0 0.0
    %v252 = vand.u32 %v51, 4294901760
    %v253 = vsub.f32 %v51, %v252
    %v254 = vand.u32 %v253, 4294901760
    %v255 = vsub.f32 %v253, %v254
    %v256 = vand.u32 %v255, 4294901760
    %257 = vmatpush1.msra.mxu0 %v256
    %258 = vmatprep.subr.mxu0 0.0
    %v259 = vand.u32 %v52, 4294901760
    %v260 = vsub.f32 %v52, %v259
    %v261 = vand.u32 %v260, 4294901760
    %v262 = vsub.f32 %v260, %v261
    %v263 = vand.u32 %v262, 4294901760
    %264 = vmatpush1.msra.mxu0 %v263
    %265 = vmatprep.subr.mxu0 0.0
    %v266 = vand.u32 %v53, 4294901760
    %v267 = vsub.f32 %v53, %v266
    %v268 = vand.u32 %v267, 4294901760
    %v269 = vsub.f32 %v267, %v268
    %v270 = vand.u32 %v269, 4294901760
    %271 = vmatpush1.msra.mxu0 %v270
    %272 = vmatprep.subr.mxu0 0.0
    %v273 = vand.u32 %v54, 4294901760
    %v274 = vsub.f32 %v54, %v273
    %v275 = vand.u32 %v274, 4294901760
    %v276 = vsub.f32 %v274, %v275
    %v277 = vand.u32 %v276, 4294901760
    %278 = vmatpush1.msra.mxu0 %v277
    %279 = vmatprep.subr.mxu0 0.0
    %v280 = vand.u32 %v55, 4294901760
    %v281 = vsub.f32 %v55, %v280
    %v282 = vand.u32 %v281, 4294901760
    %v283 = vsub.f32 %v281, %v282
    %v284 = vand.u32 %v283, 4294901760
    %285 = vmatpush1.msra.mxu0 %v284
    %286 = vmatprep.subr.mxu0 0.0
    %v287 = vand.u32 %v56, 4294901760
    %v288 = vsub.f32 %v56, %v287
    %v289 = vand.u32 %v288, 4294901760
    %v290 = vsub.f32 %v288, %v289
    %v291 = vand.u32 %v290, 4294901760
    %292 = vmatpush1.msra.mxu0 %v291
    %293 = vmatprep.subr.mxu0 0.0
    %v294 = vand.u32 %v57, 4294901760
    %v295 = vsub.f32 %v57, %v294
    %v296 = vand.u32 %v295, 4294901760
    %v297 = vsub.f32 %v295, %v296
    %v298 = vand.u32 %v297, 4294901760
    %299 = vmatpush1.msra.mxu0 %v298
    %300 = vmatprep.subr.mxu0 0.0
    %v301 = vand.u32 %v58, 4294901760
    %v302 = vsub.f32 %v58, %v301
    %v303 = vand.u32 %v302, 4294901760
    %v304 = vsub.f32 %v302, %v303
    %v305 = vand.u32 %v304, 4294901760
    %306 = vmatpush1.msra.mxu0 %v305
    %307 = vmatprep.subr.mxu0 0.0
    %v308 = vand.u32 %v59, 4294901760
    %v309 = vsub.f32 %v59, %v308
    %v310 = vand.u32 %v309, 4294901760
    %v311 = vsub.f32 %v309, %v310
    %v312 = vand.u32 %v311, 4294901760
    %313 = vmatpush1.msra.mxu0 %v312
    %314 = vmatprep.subr.mxu0 0.0
    %v315 = vand.u32 %v60, 4294901760
    %v316 = vsub.f32 %v60, %v315
    %v317 = vand.u32 %v316, 4294901760
    %v318 = vsub.f32 %v316, %v317
    %v319 = vand.u32 %v318, 4294901760
    %320 = vmatpush1.msra.mxu0 %v319
    %321 = vmatprep.subr.mxu0 0.0
    %v322 = vand.u32 %v61, 4294901760
    %v323 = vsub.f32 %v61, %v322
    %v324 = vand.u32 %v323, 4294901760
    %v325 = vsub.f32 %v323, %v324
    %v326 = vand.u32 %v325, 4294901760
    %327 = vmatpush1.msra.mxu0 %v326
    %328 = vmatprep.subr.mxu0 0.0
    %v329 = vand.u32 %v62, 4294901760
    %v330 = vsub.f32 %v62, %v329
    %v331 = vand.u32 %v330, 4294901760
    %v332 = vsub.f32 %v330, %v331
    %v333 = vand.u32 %v332, 4294901760
    %334 = vmatpush1.msra.mxu0 %v333
    %335 = vmatprep.subr.mxu0 0.0
    %v336 = vand.u32 %v63, 4294901760
    %v337 = vsub.f32 %v63, %v336
    %v338 = vand.u32 %v337, 4294901760
    %v339 = vsub.f32 %v337, %v338
    %v340 = vand.u32 %v339, 4294901760
    %341 = vmatpush1.msra.mxu0 %v340
    %342 = vmatprep.subr.mxu0 0.0
    %v343 = vand.u32 %v64, 4294901760
    %v344 = vsub.f32 %v64, %v343
    %v345 = vand.u32 %v344, 4294901760
    %v346 = vsub.f32 %v344, %v345
    %v347 = vand.u32 %v346, 4294901760
    %348 = vmatpush1.msra.mxu0 %v347
    %349 = vmatprep.subr.mxu0 0.0
    %v350 = vand.u32 %v65, 4294901760
    %v351 = vsub.f32 %v65, %v350
    %v352 = vand.u32 %v351, 4294901760
    %v353 = vsub.f32 %v351, %v352
    %v354 = vand.u32 %v353, 4294901760
    %355 = vmatpush1.msra.mxu0 %v354
    %356 = vmatprep.subr.mxu0 0.0
    %v357 = vand.u32 %v66, 4294901760
    %v358 = vsub.f32 %v66, %v357
    %v359 = vand.u32 %v358, 4294901760
    %v360 = vsub.f32 %v358, %v359
    %v361 = vand.u32 %v360, 4294901760
    %362 = vmatpush1.msra.mxu0 %v361
    %363 = vmatprep.subr.mxu0 0.0
    %v364 = vand.u32 %v67, 4294901760
    %v365 = vsub.f32 %v67, %v364
    %v366 = vand.u32 %v365, 4294901760
    %v367 = vsub.f32 %v365, %v366
    %v368 = vand.u32 %v367, 4294901760
    %369 = vmatpush1.msra.mxu0 %v368
    %370 = vmatprep.subr.mxu0 0.0
    %v371 = vand.u32 %v68, 4294901760
    %v372 = vsub.f32 %v68, %v371
    %v373 = vand.u32 %v372, 4294901760
    %v374 = vsub.f32 %v372, %v373
    %v375 = vand.u32 %v374, 4294901760
    %376 = vmatpush1.msra.mxu0 %v375
    %377 = vmatprep.subr.mxu0 0.0
    %v378 = vand.u32 %v69, 4294901760
    %v379 = vsub.f32 %v69, %v378
    %v380 = vand.u32 %v379, 4294901760
    %v381 = vsub.f32 %v379, %v380
    %v382 = vand.u32 %v381, 4294901760
    %383 = vmatpush1.msra.mxu0 %v382
    %384 = vmatprep.subr.mxu0 0.0
    %v385 = vand.u32 %v70, 4294901760
    %v386 = vsub.f32 %v70, %v385
    %v387 = vand.u32 %v386, 4294901760
    %v388 = vsub.f32 %v386, %v387
    %v389 = vand.u32 %v388, 4294901760
    %390 = vmatpush1.msra.mxu0 %v389
    %391 = vmatprep.subr.mxu0 0.0
    %v392 = vand.u32 %v71, 4294901760
    %v393 = vsub.f32 %v71, %v392
    %v394 = vand.u32 %v393, 4294901760
    %v395 = vsub.f32 %v393, %v394
    %v396 = vand.u32 %v395, 4294901760
    %397 = vmatpush1.msra.mxu0 %v396
    %398 = vmatprep.subr.mxu0 0.0
    %v399 = vand.u32 %v72, 4294901760
    %v400 = vsub.f32 %v72, %v399
    %v401 = vand.u32 %v400, 4294901760
    %v402 = vsub.f32 %v400, %v401
    %v403 = vand.u32 %v402, 4294901760
    %404 = vmatpush1.msra.mxu0 %v403
    %405 = vmatprep.subr.mxu0 0.0
    %v406 = vand.u32 %v73, 4294901760
    %v407 = vsub.f32 %v73, %v406
    %v408 = vand.u32 %v407, 4294901760
    %v409 = vsub.f32 %v407, %v408
    %v410 = vand.u32 %v409, 4294901760
    %411 = vmatpush1.msra.mxu0 %v410
    %412 = vmatprep.subr.mxu0 0.0
    %v413 = vand.u32 %v74, 4294901760
    %v414 = vsub.f32 %v74, %v413
    %v415 = vand.u32 %v414, 4294901760
    %v416 = vsub.f32 %v414, %v415
    %v417 = vand.u32 %v416, 4294901760
    %418 = vmatpush1.msra.mxu0 %v417
    %419 = vmatprep.subr.mxu0 0.0
    %v420 = vand.u32 %v75, 4294901760
    %v421 = vsub.f32 %v75, %v420
    %v422 = vand.u32 %v421, 4294901760
    %v423 = vsub.f32 %v421, %v422
    %v424 = vand.u32 %v423, 4294901760
    %425 = vmatpush1.msra.mxu0 %v424
    %426 = vmatprep.subr.mxu0 0.0
    %v427 = vand.u32 %v76, 4294901760
    %v428 = vsub.f32 %v76, %v427
    %v429 = vand.u32 %v428, 4294901760
    %v430 = vsub.f32 %v428, %v429
    %v431 = vand.u32 %v430, 4294901760
    %432 = vmatpush1.msra.mxu0 %v431
    %433 = vmatprep.subr.mxu0 0.0
    %v434 = vand.u32 %v77, 4294901760
    %v435 = vsub.f32 %v77, %v434
    %v436 = vand.u32 %v435, 4294901760
    %v437 = vsub.f32 %v435, %v436
    %v438 = vand.u32 %v437, 4294901760
    %439 = vmatpush1.msra.mxu0 %v438
    %440 = vmatprep.subr.mxu0 0.0
    %v441 = vand.u32 %v78, 4294901760
    %v442 = vsub.f32 %v78, %v441
    %v443 = vand.u32 %v442, 4294901760
    %v444 = vsub.f32 %v442, %v443
    %v445 = vand.u32 %v444, 4294901760
    %446 = vmatpush1.msra.mxu0 %v445
    %447 = vmatprep.subr.mxu0 0.0
    %v448 = vand.u32 %v79, 4294901760
    %v449 = vsub.f32 %v79, %v448
    %v450 = vand.u32 %v449, 4294901760
    %v451 = vsub.f32 %v449, %v450
    %v452 = vand.u32 %v451, 4294901760
    %453 = vmatpush1.msra.mxu0 %v452
    %v454 = vand.u32 %v114, 4294901760
    %455 = vmatprep.mubr.f32.mxu0 %v454
    %v456 = vand.u32 %v46, 4294901760
    %457 = vmatmul.mubr.f32.gmra.mrb[0].mxu0 %v456
    %v458 = vpop.f32.mrb[0].mxu0
    %v459 = vadd.f32 %v227, %v458
    %v460 = vpop.f32.mrb[0].mxu0
    %461 = vdwg.mxu0
    %462 = vmatprep.subr.mxu0 0.0
    %v463 = vand.u32 %v48, 4294901760
    %v464 = vsub.f32 %v48, %v463
    %465 = vmatpush1.msra.mxu0 %v464
    %466 = vmatprep.subr.mxu0 0.0
    %v467 = vand.u32 %v49, 4294901760
    %v468 = vsub.f32 %v49, %v467
    %469 = vmatpush1.msra.mxu0 %v468
    %470 = vmatprep.subr.mxu0 0.0
    %v471 = vand.u32 %v50, 4294901760
    %v472 = vsub.f32 %v50, %v471
    %473 = vmatpush1.msra.mxu0 %v472
    %474 = vmatprep.subr.mxu0 0.0
    %v475 = vand.u32 %v51, 4294901760
    %v476 = vsub.f32 %v51, %v475
    %477 = vmatpush1.msra.mxu0 %v476
    %478 = vmatprep.subr.mxu0 0.0
    %v479 = vand.u32 %v52, 4294901760
    %v480 = vsub.f32 %v52, %v479
    %481 = vmatpush1.msra.mxu0 %v480
    %482 = vmatprep.subr.mxu0 0.0
    %v483 = vand.u32 %v53, 4294901760
    %v484 = vsub.f32 %v53, %v483
    %485 = vmatpush1.msra.mxu0 %v484
    %486 = vmatprep.subr.mxu0 0.0
    %v487 = vand.u32 %v54, 4294901760
    %v488 = vsub.f32 %v54, %v487
    %489 = vmatpush1.msra.mxu0 %v488
    %490 = vmatprep.subr.mxu0 0.0
    %v491 = vand.u32 %v55, 4294901760
    %v492 = vsub.f32 %v55, %v491
    %493 = vmatpush1.msra.mxu0 %v492
    %494 = vmatprep.subr.mxu0 0.0
    %v495 = vand.u32 %v56, 4294901760
    %v496 = vsub.f32 %v56, %v495
    %497 = vmatpush1.msra.mxu0 %v496
    %498 = vmatprep.subr.mxu0 0.0
    %v499 = vand.u32 %v57, 4294901760
    %v500 = vsub.f32 %v57, %v499
    %501 = vmatpush1.msra.mxu0 %v500
    %502 = vmatprep.subr.mxu0 0.0
    %v503 = vand.u32 %v58, 4294901760
    %v504 = vsub.f32 %v58, %v503
    %505 = vmatpush1.msra.mxu0 %v504
    %506 = vmatprep.subr.mxu0 0.0
    %v507 = vand.u32 %v59, 4294901760
    %v508 = vsub.f32 %v59, %v507
    %509 = vmatpush1.msra.mxu0 %v508
    %510 = vmatprep.subr.mxu0 0.0
    %v511 = vand.u32 %v60, 4294901760
    %v512 = vsub.f32 %v60, %v511
    %513 = vmatpush1.msra.mxu0 %v512
    %514 = vmatprep.subr.mxu0 0.0
    %v515 = vand.u32 %v61, 4294901760
    %v516 = vsub.f32 %v61, %v515
    %517 = vmatpush1.msra.mxu0 %v516
    %518 = vmatprep.subr.mxu0 0.0
    %v519 = vand.u32 %v62, 4294901760
    %v520 = vsub.f32 %v62, %v519
    %521 = vmatpush1.msra.mxu0 %v520
    %522 = vmatprep.subr.mxu0 0.0
    %v523 = vand.u32 %v63, 4294901760
    %v524 = vsub.f32 %v63, %v523
    %525 = vmatpush1.msra.mxu0 %v524
    %526 = vmatprep.subr.mxu0 0.0
    %v527 = vand.u32 %v64, 4294901760
    %v528 = vsub.f32 %v64, %v527
    %529 = vmatpush1.msra.mxu0 %v528
    %530 = vmatprep.subr.mxu0 0.0
    %v531 = vand.u32 %v65, 4294901760
    %v532 = vsub.f32 %v65, %v531
    %533 = vmatpush1.msra.mxu0 %v532
    %534 = vmatprep.subr.mxu0 0.0
    %v535 = vand.u32 %v66, 4294901760
    %v536 = vsub.f32 %v66, %v535
    %537 = vmatpush1.msra.mxu0 %v536
    %538 = vmatprep.subr.mxu0 0.0
    %v539 = vand.u32 %v67, 4294901760
    %v540 = vsub.f32 %v67, %v539
    %541 = vmatpush1.msra.mxu0 %v540
    %542 = vmatprep.subr.mxu0 0.0
    %v543 = vand.u32 %v68, 4294901760
    %v544 = vsub.f32 %v68, %v543
    %545 = vmatpush1.msra.mxu0 %v544
    %546 = vmatprep.subr.mxu0 0.0
    %v547 = vand.u32 %v69, 4294901760
    %v548 = vsub.f32 %v69, %v547
    %549 = vmatpush1.msra.mxu0 %v548
    %550 = vmatprep.subr.mxu0 0.0
    %v551 = vand.u32 %v70, 4294901760
    %v552 = vsub.f32 %v70, %v551
    %553 = vmatpush1.msra.mxu0 %v552
    %554 = vmatprep.subr.mxu0 0.0
    %v555 = vand.u32 %v71, 4294901760
    %v556 = vsub.f32 %v71, %v555
    %557 = vmatpush1.msra.mxu0 %v556
    %558 = vmatprep.subr.mxu0 0.0
    %v559 = vand.u32 %v72, 4294901760
    %v560 = vsub.f32 %v72, %v559
    %561 = vmatpush1.msra.mxu0 %v560
    %562 = vmatprep.subr.mxu0 0.0
    %v563 = vand.u32 %v73, 4294901760
    %v564 = vsub.f32 %v73, %v563
    %565 = vmatpush1.msra.mxu0 %v564
    %566 = vmatprep.subr.mxu0 0.0
    %v567 = vand.u32 %v74, 4294901760
    %v568 = vsub.f32 %v74, %v567
    %569 = vmatpush1.msra.mxu0 %v568
    %570 = vmatprep.subr.mxu0 0.0
    %v571 = vand.u32 %v75, 4294901760
    %v572 = vsub.f32 %v75, %v571
    %573 = vmatpush1.msra.mxu0 %v572
    %574 = vmatprep.subr.mxu0 0.0
    %v575 = vand.u32 %v76, 4294901760
    %v576 = vsub.f32 %v76, %v575
    %577 = vmatpush1.msra.mxu0 %v576
    %578 = vmatprep.subr.mxu0 0.0
    %v579 = vand.u32 %v77, 4294901760
    %v580 = vsub.f32 %v77, %v579
    %581 = vmatpush1.msra.mxu0 %v580
    %582 = vmatprep.subr.mxu0 0.0
    %v583 = vand.u32 %v78, 4294901760
    %v584 = vsub.f32 %v78, %v583
    %585 = vmatpush1.msra.mxu0 %v584
    %586 = vmatprep.subr.mxu0 0.0
    %v587 = vand.u32 %v79, 4294901760
    %v588 = vsub.f32 %v79, %v587
    %589 = vmatpush1.msra.mxu0 %v588
    %v590 = vand.u32 %v114, 4294901760
    %v591 = vsub.f32 %v114, %v590
    %592 = vmatprep.mubr.f32.mxu0 %v591
    %v593 = vand.u32 %v46, 4294901760
    %v594 = vsub.f32 %v46, %v593
    %595 = vmatmul.mubr.f32.gmra.mrb[0].mxu0 %v594
    %v596 = vpop.f32.mrb[0].mxu0
    %v597 = vadd.f32 %v459, %v596
    %v598 = vpop.f32.mrb[0].mxu0
    %599 = vdwg.mxu0
    %600 = vmatprep.subr.mxu0 0.0
    %v601 = vand.u32 %v48, 4294901760
    %602 = vmatpush1.msra.mxu0 %v601
    %603 = vmatprep.subr.mxu0 0.0
    %v604 = vand.u32 %v49, 4294901760
    %605 = vmatpush1.msra.mxu0 %v604
    %606 = vmatprep.subr.mxu0 0.0
    %v607 = vand.u32 %v50, 4294901760
    %608 = vmatpush1.msra.mxu0 %v607
    %609 = vmatprep.subr.mxu0 0.0
    %v610 = vand.u32 %v51, 4294901760
    %611 = vmatpush1.msra.mxu0 %v610
    %612 = vmatprep.subr.mxu0 0.0
    %v613 = vand.u32 %v52, 4294901760
    %614 = vmatpush1.msra.mxu0 %v613
    %615 = vmatprep.subr.mxu0 0.0
    %v616 = vand.u32 %v53, 4294901760
    %617 = vmatpush1.msra.mxu0 %v616
    %618 = vmatprep.subr.mxu0 0.0
    %v619 = vand.u32 %v54, 4294901760
    %620 = vmatpush1.msra.mxu0 %v619
    %621 = vmatprep.subr.mxu0 0.0
    %v622 = vand.u32 %v55, 4294901760
    %623 = vmatpush1.msra.mxu0 %v622
    %624 = vmatprep.subr.mxu0 0.0
    %v625 = vand.u32 %v56, 4294901760
    %626 = vmatpush1.msra.mxu0 %v625
    %627 = vmatprep.subr.mxu0 0.0
    %v628 = vand.u32 %v57, 4294901760
    %629 = vmatpush1.msra.mxu0 %v628
    %630 = vmatprep.subr.mxu0 0.0
    %v631 = vand.u32 %v58, 4294901760
    %632 = vmatpush1.msra.mxu0 %v631
    %633 = vmatprep.subr.mxu0 0.0
    %v634 = vand.u32 %v59, 4294901760
    %635 = vmatpush1.msra.mxu0 %v634
    %636 = vmatprep.subr.mxu0 0.0
    %v637 = vand.u32 %v60, 4294901760
    %638 = vmatpush1.msra.mxu0 %v637
    %639 = vmatprep.subr.mxu0 0.0
    %v640 = vand.u32 %v61, 4294901760
    %641 = vmatpush1.msra.mxu0 %v640
    %642 = vmatprep.subr.mxu0 0.0
    %v643 = vand.u32 %v62, 4294901760
    %644 = vmatpush1.msra.mxu0 %v643
    %645 = vmatprep.subr.mxu0 0.0
    %v646 = vand.u32 %v63, 4294901760
    %647 = vmatpush1.msra.mxu0 %v646
    %648 = vmatprep.subr.mxu0 0.0
    %v649 = vand.u32 %v64, 4294901760
    %650 = vmatpush1.msra.mxu0 %v649
    %651 = vmatprep.subr.mxu0 0.0
    %v652 = vand.u32 %v65, 4294901760
    %653 = vmatpush1.msra.mxu0 %v652
    %654 = vmatprep.subr.mxu0 0.0
    %v655 = vand.u32 %v66, 4294901760
    %656 = vmatpush1.msra.mxu0 %v655
    %657 = vmatprep.subr.mxu0 0.0
    %v658 = vand.u32 %v67, 4294901760
    %659 = vmatpush1.msra.mxu0 %v658
    %660 = vmatprep.subr.mxu0 0.0
    %v661 = vand.u32 %v68, 4294901760
    %662 = vmatpush1.msra.mxu0 %v661
    %663 = vmatprep.subr.mxu0 0.0
    %v664 = vand.u32 %v69, 4294901760
    %665 = vmatpush1.msra.mxu0 %v664
    %666 = vmatprep.subr.mxu0 0.0
    %v667 = vand.u32 %v70, 4294901760
    %668 = vmatpush1.msra.mxu0 %v667
    %669 = vmatprep.subr.mxu0 0.0
    %v670 = vand.u32 %v71, 4294901760
    %671 = vmatpush1.msra.mxu0 %v670
    %672 = vmatprep.subr.mxu0 0.0
    %v673 = vand.u32 %v72, 4294901760
    %674 = vmatpush1.msra.mxu0 %v673
    %675 = vmatprep.subr.mxu0 0.0
    %v676 = vand.u32 %v73, 4294901760
    %677 = vmatpush1.msra.mxu0 %v676
    %678 = vmatprep.subr.mxu0 0.0
    %v679 = vand.u32 %v74, 4294901760
    %680 = vmatpush1.msra.mxu0 %v679
    %681 = vmatprep.subr.mxu0 0.0
    %v682 = vand.u32 %v75, 4294901760
    %683 = vmatpush1.msra.mxu0 %v682
    %684 = vmatprep.subr.mxu0 0.0
    %v685 = vand.u32 %v76, 4294901760
    %686 = vmatpush1.msra.mxu0 %v685
    %687 = vmatprep.subr.mxu0 0.0
    %v688 = vand.u32 %v77, 4294901760
    %689 = vmatpush1.msra.mxu0 %v688
    %690 = vmatprep.subr.mxu0 0.0
    %v691 = vand.u32 %v78, 4294901760
    %692 = vmatpush1.msra.mxu0 %v691
    %693 = vmatprep.subr.mxu0 0.0
    %v694 = vand.u32 %v79, 4294901760
    %695 = vmatpush1.msra.mxu0 %v694
    %v696 = vand.u32 %v114, 4294901760
    %v697 = vsub.f32 %v114, %v696
    %v698 = vand.u32 %v697, 4294901760
    %699 = vmatprep.mubr.f32.mxu0 %v698
    %v700 = vand.u32 %v46, 4294901760
    %v701 = vsub.f32 %v46, %v700
    %v702 = vand.u32 %v701, 4294901760
    %703 = vmatmul.mubr.f32.gmra.mrb[0].mxu0 %v702
    %v704 = vpop.f32.mrb[0].mxu0
    %v705 = vadd.f32 %v597, %v704
    %v706 = vpop.f32.mrb[0].mxu0
    %707 = vdwg.mxu0
    %708 = vmatprep.subr.mxu0 0.0
    %v709 = vand.u32 %v48, 4294901760
    %v710 = vsub.f32 %v48, %v709
    %v711 = vand.u32 %v710, 4294901760
    %712 = vmatpush1.msra.mxu0 %v711
    %713 = vmatprep.subr.mxu0 0.0
    %v714 = vand.u32 %v49, 4294901760
    %v715 = vsub.f32 %v49, %v714
    %v716 = vand.u32 %v715, 4294901760
    %717 = vmatpush1.msra.mxu0 %v716
    %718 = vmatprep.subr.mxu0 0.0
    %v719 = vand.u32 %v50, 4294901760
    %v720 = vsub.f32 %v50, %v719
    %v721 = vand.u32 %v720, 4294901760
    %722 = vmatpush1.msra.mxu0 %v721
    %723 = vmatprep.subr.mxu0 0.0
    %v724 = vand.u32 %v51, 4294901760
    %v725 = vsub.f32 %v51, %v724
    %v726 = vand.u32 %v725, 4294901760
    %727 = vmatpush1.msra.mxu0 %v726
    %728 = vmatprep.subr.mxu0 0.0
    %v729 = vand.u32 %v52, 4294901760
    %v730 = vsub.f32 %v52, %v729
    %v731 = vand.u32 %v730, 4294901760
    %732 = vmatpush1.msra.mxu0 %v731
    %733 = vmatprep.subr.mxu0 0.0
    %v734 = vand.u32 %v53, 4294901760
    %v735 = vsub.f32 %v53, %v734
    %v736 = vand.u32 %v735, 4294901760
    %737 = vmatpush1.msra.mxu0 %v736
    %738 = vmatprep.subr.mxu0 0.0
    %v739 = vand.u32 %v54, 4294901760
    %v740 = vsub.f32 %v54, %v739
    %v741 = vand.u32 %v740, 4294901760
    %742 = vmatpush1.msra.mxu0 %v741
    %743 = vmatprep.subr.mxu0 0.0
    %v744 = vand.u32 %v55, 4294901760
    %v745 = vsub.f32 %v55, %v744
    %v746 = vand.u32 %v745, 4294901760
    %747 = vmatpush1.msra.mxu0 %v746
    %748 = vmatprep.subr.mxu0 0.0
    %v749 = vand.u32 %v56, 4294901760
    %v750 = vsub.f32 %v56, %v749
    %v751 = vand.u32 %v750, 4294901760
    %752 = vmatpush1.msra.mxu0 %v751
    %753 = vmatprep.subr.mxu0 0.0
    %v754 = vand.u32 %v57, 4294901760
    %v755 = vsub.f32 %v57, %v754
    %v756 = vand.u32 %v755, 4294901760
    %757 = vmatpush1.msra.mxu0 %v756
    %758 = vmatprep.subr.mxu0 0.0
    %v759 = vand.u32 %v58, 4294901760
    %v760 = vsub.f32 %v58, %v759
    %v761 = vand.u32 %v760, 4294901760
    %762 = vmatpush1.msra.mxu0 %v761
    %763 = vmatprep.subr.mxu0 0.0
    %v764 = vand.u32 %v59, 4294901760
    %v765 = vsub.f32 %v59, %v764
    %v766 = vand.u32 %v765, 4294901760
    %767 = vmatpush1.msra.mxu0 %v766
    %768 = vmatprep.subr.mxu0 0.0
    %v769 = vand.u32 %v60, 4294901760
    %v770 = vsub.f32 %v60, %v769
    %v771 = vand.u32 %v770, 4294901760
    %772 = vmatpush1.msra.mxu0 %v771
    %773 = vmatprep.subr.mxu0 0.0
    %v774 = vand.u32 %v61, 4294901760
    %v775 = vsub.f32 %v61, %v774
    %v776 = vand.u32 %v775, 4294901760
    %777 = vmatpush1.msra.mxu0 %v776
    %778 = vmatprep.subr.mxu0 0.0
    %v779 = vand.u32 %v62, 4294901760
    %v780 = vsub.f32 %v62, %v779
    %v781 = vand.u32 %v780, 4294901760
    %782 = vmatpush1.msra.mxu0 %v781
    %783 = vmatprep.subr.mxu0 0.0
    %v784 = vand.u32 %v63, 4294901760
    %v785 = vsub.f32 %v63, %v784
    %v786 = vand.u32 %v785, 4294901760
    %787 = vmatpush1.msra.mxu0 %v786
    %788 = vmatprep.subr.mxu0 0.0
    %v789 = vand.u32 %v64, 4294901760
    %v790 = vsub.f32 %v64, %v789
    %v791 = vand.u32 %v790, 4294901760
    %792 = vmatpush1.msra.mxu0 %v791
    %793 = vmatprep.subr.mxu0 0.0
    %v794 = vand.u32 %v65, 4294901760
    %v795 = vsub.f32 %v65, %v794
    %v796 = vand.u32 %v795, 4294901760
    %797 = vmatpush1.msra.mxu0 %v796
    %798 = vmatprep.subr.mxu0 0.0
    %v799 = vand.u32 %v66, 4294901760
    %v800 = vsub.f32 %v66, %v799
    %v801 = vand.u32 %v800, 4294901760
    %802 = vmatpush1.msra.mxu0 %v801
    %803 = vmatprep.subr.mxu0 0.0
    %v804 = vand.u32 %v67, 4294901760
    %v805 = vsub.f32 %v67, %v804
    %v806 = vand.u32 %v805, 4294901760
    %807 = vmatpush1.msra.mxu0 %v806
    %808 = vmatprep.subr.mxu0 0.0
    %v809 = vand.u32 %v68, 4294901760
    %v810 = vsub.f32 %v68, %v809
    %v811 = vand.u32 %v810, 4294901760
    %812 = vmatpush1.msra.mxu0 %v811
    %813 = vmatprep.subr.mxu0 0.0
    %v814 = vand.u32 %v69, 4294901760
    %v815 = vsub.f32 %v69, %v814
    %v816 = vand.u32 %v815, 4294901760
    %817 = vmatpush1.msra.mxu0 %v816
    %818 = vmatprep.subr.mxu0 0.0
    %v819 = vand.u32 %v70, 4294901760
    %v820 = vsub.f32 %v70, %v819
    %v821 = vand.u32 %v820, 4294901760
    %822 = vmatpush1.msra.mxu0 %v821
    %823 = vmatprep.subr.mxu0 0.0
    %v824 = vand.u32 %v71, 4294901760
    %v825 = vsub.f32 %v71, %v824
    %v826 = vand.u32 %v825, 4294901760
    %827 = vmatpush1.msra.mxu0 %v826
    %828 = vmatprep.subr.mxu0 0.0
    %v829 = vand.u32 %v72, 4294901760
    %v830 = vsub.f32 %v72, %v829
    %v831 = vand.u32 %v830, 4294901760
    %832 = vmatpush1.msra.mxu0 %v831
    %833 = vmatprep.subr.mxu0 0.0
    %v834 = vand.u32 %v73, 4294901760
    %v835 = vsub.f32 %v73, %v834
    %v836 = vand.u32 %v835, 4294901760
    %837 = vmatpush1.msra.mxu0 %v836
    %838 = vmatprep.subr.mxu0 0.0
    %v839 = vand.u32 %v74, 4294901760
    %v840 = vsub.f32 %v74, %v839
    %v841 = vand.u32 %v840, 4294901760
    %842 = vmatpush1.msra.mxu0 %v841
    %843 = vmatprep.subr.mxu0 0.0
    %v844 = vand.u32 %v75, 4294901760
    %v845 = vsub.f32 %v75, %v844
    %v846 = vand.u32 %v845, 4294901760
    %847 = vmatpush1.msra.mxu0 %v846
    %848 = vmatprep.subr.mxu0 0.0
    %v849 = vand.u32 %v76, 4294901760
    %v850 = vsub.f32 %v76, %v849
    %v851 = vand.u32 %v850, 4294901760
    %852 = vmatpush1.msra.mxu0 %v851
    %853 = vmatprep.subr.mxu0 0.0
    %v854 = vand.u32 %v77, 4294901760
    %v855 = vsub.f32 %v77, %v854
    %v856 = vand.u32 %v855, 4294901760
    %857 = vmatpush1.msra.mxu0 %v856
    %858 = vmatprep.subr.mxu0 0.0
    %v859 = vand.u32 %v78, 4294901760
    %v860 = vsub.f32 %v78, %v859
    %v861 = vand.u32 %v860, 4294901760
    %862 = vmatpush1.msra.mxu0 %v861
    %863 = vmatprep.subr.mxu0 0.0
    %v864 = vand.u32 %v79, 4294901760
    %v865 = vsub.f32 %v79, %v864
    %v866 = vand.u32 %v865, 4294901760
    %867 = vmatpush1.msra.mxu0 %v866
    %v868 = vand.u32 %v114, 4294901760
    %869 = vmatprep.mubr.f32.mxu0 %v868
    %v870 = vand.u32 %v46, 4294901760
    %871 = vmatmul.mubr.f32.gmra.mrb[0].mxu0 %v870
    %v872 = vpop.f32.mrb[0].mxu0
    %v873 = vadd.f32 %v705, %v872
    %v874 = vpop.f32.mrb[0].mxu0
    %875 = vdwg.mxu0
    %876 = vmatprep.subr.mxu0 0.0
    %v877 = vand.u32 %v48, 4294901760
    %878 = vmatpush1.msra.mxu0 %v877
    %879 = vmatprep.subr.mxu0 0.0
    %v880 = vand.u32 %v49, 4294901760
    %881 = vmatpush1.msra.mxu0 %v880
    %882 = vmatprep.subr.mxu0 0.0
    %v883 = vand.u32 %v50, 4294901760
    %884 = vmatpush1.msra.mxu0 %v883
    %885 = vmatprep.subr.mxu0 0.0
    %v886 = vand.u32 %v51, 4294901760
    %887 = vmatpush1.msra.mxu0 %v886
    %888 = vmatprep.subr.mxu0 0.0
    %v889 = vand.u32 %v52, 4294901760
    %890 = vmatpush1.msra.mxu0 %v889
    %891 = vmatprep.subr.mxu0 0.0
    %v892 = vand.u32 %v53, 4294901760
    %893 = vmatpush1.msra.mxu0 %v892
    %894 = vmatprep.subr.mxu0 0.0
    %v895 = vand.u32 %v54, 4294901760
    %896 = vmatpush1.msra.mxu0 %v895
    %897 = vmatprep.subr.mxu0 0.0
    %v898 = vand.u32 %v55, 4294901760
    %899 = vmatpush1.msra.mxu0 %v898
    %900 = vmatprep.subr.mxu0 0.0
    %v901 = vand.u32 %v56, 4294901760
    %902 = vmatpush1.msra.mxu0 %v901
    %903 = vmatprep.subr.mxu0 0.0
    %v904 = vand.u32 %v57, 4294901760
    %905 = vmatpush1.msra.mxu0 %v904
    %906 = vmatprep.subr.mxu0 0.0
    %v907 = vand.u32 %v58, 4294901760
    %908 = vmatpush1.msra.mxu0 %v907
    %909 = vmatprep.subr.mxu0 0.0
    %v910 = vand.u32 %v59, 4294901760
    %911 = vmatpush1.msra.mxu0 %v910
    %912 = vmatprep.subr.mxu0 0.0
    %v913 = vand.u32 %v60, 4294901760
    %914 = vmatpush1.msra.mxu0 %v913
    %915 = vmatprep.subr.mxu0 0.0
    %v916 = vand.u32 %v61, 4294901760
    %917 = vmatpush1.msra.mxu0 %v916
    %918 = vmatprep.subr.mxu0 0.0
    %v919 = vand.u32 %v62, 4294901760
    %920 = vmatpush1.msra.mxu0 %v919
    %921 = vmatprep.subr.mxu0 0.0
    %v922 = vand.u32 %v63, 4294901760
    %923 = vmatpush1.msra.mxu0 %v922
    %924 = vmatprep.subr.mxu0 0.0
    %v925 = vand.u32 %v64, 4294901760
    %926 = vmatpush1.msra.mxu0 %v925
    %927 = vmatprep.subr.mxu0 0.0
    %v928 = vand.u32 %v65, 4294901760
    %929 = vmatpush1.msra.mxu0 %v928
    %930 = vmatprep.subr.mxu0 0.0
    %v931 = vand.u32 %v66, 4294901760
    %932 = vmatpush1.msra.mxu0 %v931
    %933 = vmatprep.subr.mxu0 0.0
    %v934 = vand.u32 %v67, 4294901760
    %935 = vmatpush1.msra.mxu0 %v934
    %936 = vmatprep.subr.mxu0 0.0
    %v937 = vand.u32 %v68, 4294901760
    %938 = vmatpush1.msra.mxu0 %v937
    %939 = vmatprep.subr.mxu0 0.0
    %v940 = vand.u32 %v69, 4294901760
    %941 = vmatpush1.msra.mxu0 %v940
    %942 = vmatprep.subr.mxu0 0.0
    %v943 = vand.u32 %v70, 4294901760
    %944 = vmatpush1.msra.mxu0 %v943
    %945 = vmatprep.subr.mxu0 0.0
    %v946 = vand.u32 %v71, 4294901760
    %947 = vmatpush1.msra.mxu0 %v946
    %948 = vmatprep.subr.mxu0 0.0
    %v949 = vand.u32 %v72, 4294901760
    %950 = vmatpush1.msra.mxu0 %v949
    %951 = vmatprep.subr.mxu0 0.0
    %v952 = vand.u32 %v73, 4294901760
    %953 = vmatpush1.msra.mxu0 %v952
    %954 = vmatprep.subr.mxu0 0.0
    %v955 = vand.u32 %v74, 4294901760
    %956 = vmatpush1.msra.mxu0 %v955
    %957 = vmatprep.subr.mxu0 0.0
    %v958 = vand.u32 %v75, 4294901760
    %959 = vmatpush1.msra.mxu0 %v958
    %960 = vmatprep.subr.mxu0 0.0
    %v961 = vand.u32 %v76, 4294901760
    %962 = vmatpush1.msra.mxu0 %v961
    %963 = vmatprep.subr.mxu0 0.0
    %v964 = vand.u32 %v77, 4294901760
    %965 = vmatpush1.msra.mxu0 %v964
    %966 = vmatprep.subr.mxu0 0.0
    %v967 = vand.u32 %v78, 4294901760
    %968 = vmatpush1.msra.mxu0 %v967
    %969 = vmatprep.subr.mxu0 0.0
    %v970 = vand.u32 %v79, 4294901760
    %971 = vmatpush1.msra.mxu0 %v970
    %v972 = vand.u32 %v114, 4294901760
    %973 = vmatprep.mubr.f32.mxu0 %v972
    %v974 = vand.u32 %v46, 4294901760
    %975 = vmatmul.mubr.f32.gmra.mrb[0].mxu0 %v974
    %v976 = vpop.f32.mrb[0].mxu0
    %v977 = vadd.f32 %v873, %v976
    %v978 = vpop.f32.mrb[0].mxu0
    %979 = vdwg.mxu0
    %980 = vmatprep.subr.mxu0 0.0
    %v981 = vand.u32 %v80, 4294901760
    %982 = vmatpush1.msra.mxu0 %v981
    %983 = vmatprep.subr.mxu0 0.0
    %v984 = vand.u32 %v81, 4294901760
    %985 = vmatpush1.msra.mxu0 %v984
    %986 = vmatprep.subr.mxu0 0.0
    %v987 = vand.u32 %v82, 4294901760
    %988 = vmatpush1.msra.mxu0 %v987
    %989 = vmatprep.subr.mxu0 0.0
    %v990 = vand.u32 %v83, 4294901760
    %991 = vmatpush1.msra.mxu0 %v990
    %992 = vmatprep.subr.mxu0 0.0
    %v993 = vand.u32 %v84, 4294901760
    %994 = vmatpush1.msra.mxu0 %v993
    %995 = vmatprep.subr.mxu0 0.0
    %v996 = vand.u32 %v85, 4294901760
    %997 = vmatpush1.msra.mxu0 %v996
    %998 = vmatprep.subr.mxu0 0.0
    %v999 = vand.u32 %v86, 4294901760
    %1000 = vmatpush1.msra.mxu0 %v999
    %1001 = vmatprep.subr.mxu0 0.0
    %v1002 = vand.u32 %v87, 4294901760
    %1003 = vmatpush1.msra.mxu0 %v1002
    %1004 = vmatprep.subr.mxu0 0.0
    %v1005 = vand.u32 %v88, 4294901760
    %1006 = vmatpush1.msra.mxu0 %v1005
    %1007 = vmatprep.subr.mxu0 0.0
    %v1008 = vand.u32 %v89, 4294901760
    %1009 = vmatpush1.msra.mxu0 %v1008
    %1010 = vmatprep.subr.mxu0 0.0
    %v1011 = vand.u32 %v90, 4294901760
    %1012 = vmatpush1.msra.mxu0 %v1011
    %1013 = vmatprep.subr.mxu0 0.0
    %v1014 = vand.u32 %v91, 4294901760
    %1015 = vmatpush1.msra.mxu0 %v1014
    %1016 = vmatprep.subr.mxu0 0.0
    %v1017 = vand.u32 %v92, 4294901760
    %1018 = vmatpush1.msra.mxu0 %v1017
    %1019 = vmatprep.subr.mxu0 0.0
    %v1020 = vand.u32 %v93, 4294901760
    %1021 = vmatpush1.msra.mxu0 %v1020
    %1022 = vmatprep.subr.mxu0 0.0
    %v1023 = vand.u32 %v94, 4294901760
    %1024 = vmatpush1.msra.mxu0 %v1023
    %1025 = vmatprep.subr.mxu0 0.0
    %v1026 = vand.u32 %v95, 4294901760
    %1027 = vmatpush1.msra.mxu0 %v1026
    %1028 = vmatprep.subr.mxu0 0.0
    %v1029 = vand.u32 %v96, 4294901760
    %1030 = vmatpush1.msra.mxu0 %v1029
    %1031 = vmatprep.subr.mxu0 0.0
    %v1032 = vand.u32 %v97, 4294901760
    %1033 = vmatpush1.msra.mxu0 %v1032
    %1034 = vmatprep.subr.mxu0 0.0
    %v1035 = vand.u32 %v98, 4294901760
    %1036 = vmatpush1.msra.mxu0 %v1035
    %1037 = vmatprep.subr.mxu0 0.0
    %v1038 = vand.u32 %v99, 4294901760
    %1039 = vmatpush1.msra.mxu0 %v1038
    %1040 = vmatprep.subr.mxu0 0.0
    %v1041 = vand.u32 %v100, 4294901760
    %1042 = vmatpush1.msra.mxu0 %v1041
    %1043 = vmatprep.subr.mxu0 0.0
    %v1044 = vand.u32 %v101, 4294901760
    %1045 = vmatpush1.msra.mxu0 %v1044
    %1046 = vmatprep.subr.mxu0 0.0
    %v1047 = vand.u32 %v102, 4294901760
    %1048 = vmatpush1.msra.mxu0 %v1047
    %1049 = vmatprep.subr.mxu0 0.0
    %v1050 = vand.u32 %v103, 4294901760
    %1051 = vmatpush1.msra.mxu0 %v1050
    %1052 = vmatprep.subr.mxu0 0.0
    %v1053 = vand.u32 %v104, 4294901760
    %1054 = vmatpush1.msra.mxu0 %v1053
    %1055 = vmatprep.subr.mxu0 0.0
    %v1056 = vand.u32 %v105, 4294901760
    %1057 = vmatpush1.msra.mxu0 %v1056
    %1058 = vmatprep.subr.mxu0 0.0
    %v1059 = vand.u32 %v106, 4294901760
    %1060 = vmatpush1.msra.mxu0 %v1059
    %1061 = vmatprep.subr.mxu0 0.0
    %v1062 = vand.u32 %v107, 4294901760
    %1063 = vmatpush1.msra.mxu0 %v1062
    %1064 = vmatprep.subr.mxu0 0.0
    %v1065 = vand.u32 %v108, 4294901760
    %1066 = vmatpush1.msra.mxu0 %v1065
    %1067 = vmatprep.subr.mxu0 0.0
    %v1068 = vand.u32 %v109, 4294901760
    %1069 = vmatpush1.msra.mxu0 %v1068
    %1070 = vmatprep.subr.mxu0 0.0
    %v1071 = vand.u32 %v110, 4294901760
    %1072 = vmatpush1.msra.mxu0 %v1071
    %1073 = vmatprep.subr.mxu0 0.0
    %v1074 = vand.u32 %v111, 4294901760
    %1075 = vmatpush1.msra.mxu0 %v1074
    %v1076 = vand.u32 %v115, 4294901760
    %v1077 = vsub.f32 %v115, %v1076
    %v1078 = vand.u32 %v1077, 4294901760
    %v1079 = vsub.f32 %v1077, %v1078
    %v1080 = vand.u32 %v1079, 4294901760
    %1081 = vmatprep.mubr.f32.mxu0 %v1080
    %v1082 = vand.u32 %v47, 4294901760
    %v1083 = vsub.f32 %v47, %v1082
    %v1084 = vand.u32 %v1083, 4294901760
    %v1085 = vsub.f32 %v1083, %v1084
    %v1086 = vand.u32 %v1085, 4294901760
    %1087 = vmatmul.mubr.f32.gmra.mrb[0].mxu0 %v1086
    %v1088 = vpop.f32.mrb[0].mxu0
    %v1089 = vadd.f32 %v977, %v1088
    %v1090 = vpop.f32.mrb[0].mxu0
    %1091 = vdwg.mxu0
    %1092 = vmatprep.subr.mxu0 0.0
    %v1093 = vand.u32 %v80, 4294901760
    %v1094 = vsub.f32 %v80, %v1093
    %v1095 = vand.u32 %v1094, 4294901760
    %v1096 = vsub.f32 %v1094, %v1095
    %v1097 = vand.u32 %v1096, 4294901760
    %1098 = vmatpush1.msra.mxu0 %v1097
    %1099 = vmatprep.subr.mxu0 0.0
    %v1100 = vand.u32 %v81, 4294901760
    %v1101 = vsub.f32 %v81, %v1100
    %v1102 = vand.u32 %v1101, 4294901760
    %v1103 = vsub.f32 %v1101, %v1102
    %v1104 = vand.u32 %v1103, 4294901760
    %1105 = vmatpush1.msra.mxu0 %v1104
    %1106 = vmatprep.subr.mxu0 0.0
    %v1107 = vand.u32 %v82, 4294901760
    %v1108 = vsub.f32 %v82, %v1107
    %v1109 = vand.u32 %v1108, 4294901760
    %v1110 = vsub.f32 %v1108, %v1109
    %v1111 = vand.u32 %v1110, 4294901760
    %1112 = vmatpush1.msra.mxu0 %v1111
    %1113 = vmatprep.subr.mxu0 0.0
    %v1114 = vand.u32 %v83, 4294901760
    %v1115 = vsub.f32 %v83, %v1114
    %v1116 = vand.u32 %v1115, 4294901760
    %v1117 = vsub.f32 %v1115, %v1116
    %v1118 = vand.u32 %v1117, 4294901760
    %1119 = vmatpush1.msra.mxu0 %v1118
    %1120 = vmatprep.subr.mxu0 0.0
    %v1121 = vand.u32 %v84, 4294901760
    %v1122 = vsub.f32 %v84, %v1121
    %v1123 = vand.u32 %v1122, 4294901760
    %v1124 = vsub.f32 %v1122, %v1123
    %v1125 = vand.u32 %v1124, 4294901760
    %1126 = vmatpush1.msra.mxu0 %v1125
    %1127 = vmatprep.subr.mxu0 0.0
    %v1128 = vand.u32 %v85, 4294901760
    %v1129 = vsub.f32 %v85, %v1128
    %v1130 = vand.u32 %v1129, 4294901760
    %v1131 = vsub.f32 %v1129, %v1130
    %v1132 = vand.u32 %v1131, 4294901760
    %1133 = vmatpush1.msra.mxu0 %v1132
    %1134 = vmatprep.subr.mxu0 0.0
    %v1135 = vand.u32 %v86, 4294901760
    %v1136 = vsub.f32 %v86, %v1135
    %v1137 = vand.u32 %v1136, 4294901760
    %v1138 = vsub.f32 %v1136, %v1137
    %v1139 = vand.u32 %v1138, 4294901760
    %1140 = vmatpush1.msra.mxu0 %v1139
    %1141 = vmatprep.subr.mxu0 0.0
    %v1142 = vand.u32 %v87, 4294901760
    %v1143 = vsub.f32 %v87, %v1142
    %v1144 = vand.u32 %v1143, 4294901760
    %v1145 = vsub.f32 %v1143, %v1144
    %v1146 = vand.u32 %v1145, 4294901760
    %1147 = vmatpush1.msra.mxu0 %v1146
    %1148 = vmatprep.subr.mxu0 0.0
    %v1149 = vand.u32 %v88, 4294901760
    %v1150 = vsub.f32 %v88, %v1149
    %v1151 = vand.u32 %v1150, 4294901760
    %v1152 = vsub.f32 %v1150, %v1151
    %v1153 = vand.u32 %v1152, 4294901760
    %1154 = vmatpush1.msra.mxu0 %v1153
    %1155 = vmatprep.subr.mxu0 0.0
    %v1156 = vand.u32 %v89, 4294901760
    %v1157 = vsub.f32 %v89, %v1156
    %v1158 = vand.u32 %v1157, 4294901760
    %v1159 = vsub.f32 %v1157, %v1158
    %v1160 = vand.u32 %v1159, 4294901760
    %1161 = vmatpush1.msra.mxu0 %v1160
    %1162 = vmatprep.subr.mxu0 0.0
    %v1163 = vand.u32 %v90, 4294901760
    %v1164 = vsub.f32 %v90, %v1163
    %v1165 = vand.u32 %v1164, 4294901760
    %v1166 = vsub.f32 %v1164, %v1165
    %v1167 = vand.u32 %v1166, 4294901760
    %1168 = vmatpush1.msra.mxu0 %v1167
    %1169 = vmatprep.subr.mxu0 0.0
    %v1170 = vand.u32 %v91, 4294901760
    %v1171 = vsub.f32 %v91, %v1170
    %v1172 = vand.u32 %v1171, 4294901760
    %v1173 = vsub.f32 %v1171, %v1172
    %v1174 = vand.u32 %v1173, 4294901760
    %1175 = vmatpush1.msra.mxu0 %v1174
    %1176 = vmatprep.subr.mxu0 0.0
    %v1177 = vand.u32 %v92, 4294901760
    %v1178 = vsub.f32 %v92, %v1177
    %v1179 = vand.u32 %v1178, 4294901760
    %v1180 = vsub.f32 %v1178, %v1179
    %v1181 = vand.u32 %v1180, 4294901760
    %1182 = vmatpush1.msra.mxu0 %v1181
    %1183 = vmatprep.subr.mxu0 0.0
    %v1184 = vand.u32 %v93, 4294901760
    %v1185 = vsub.f32 %v93, %v1184
    %v1186 = vand.u32 %v1185, 4294901760
    %v1187 = vsub.f32 %v1185, %v1186
    %v1188 = vand.u32 %v1187, 4294901760
    %1189 = vmatpush1.msra.mxu0 %v1188
    %1190 = vmatprep.subr.mxu0 0.0
    %v1191 = vand.u32 %v94, 4294901760
    %v1192 = vsub.f32 %v94, %v1191
    %v1193 = vand.u32 %v1192, 4294901760
    %v1194 = vsub.f32 %v1192, %v1193
    %v1195 = vand.u32 %v1194, 4294901760
    %1196 = vmatpush1.msra.mxu0 %v1195
    %1197 = vmatprep.subr.mxu0 0.0
    %v1198 = vand.u32 %v95, 4294901760
    %v1199 = vsub.f32 %v95, %v1198
    %v1200 = vand.u32 %v1199, 4294901760
    %v1201 = vsub.f32 %v1199, %v1200
    %v1202 = vand.u32 %v1201, 4294901760
    %1203 = vmatpush1.msra.mxu0 %v1202
    %1204 = vmatprep.subr.mxu0 0.0
    %v1205 = vand.u32 %v96, 4294901760
    %v1206 = vsub.f32 %v96, %v1205
    %v1207 = vand.u32 %v1206, 4294901760
    %v1208 = vsub.f32 %v1206, %v1207
    %v1209 = vand.u32 %v1208, 4294901760
    %1210 = vmatpush1.msra.mxu0 %v1209
    %1211 = vmatprep.subr.mxu0 0.0
    %v1212 = vand.u32 %v97, 4294901760
    %v1213 = vsub.f32 %v97, %v1212
    %v1214 = vand.u32 %v1213, 4294901760
    %v1215 = vsub.f32 %v1213, %v1214
    %v1216 = vand.u32 %v1215, 4294901760
    %1217 = vmatpush1.msra.mxu0 %v1216
    %1218 = vmatprep.subr.mxu0 0.0
    %v1219 = vand.u32 %v98, 4294901760
    %v1220 = vsub.f32 %v98, %v1219
    %v1221 = vand.u32 %v1220, 4294901760
    %v1222 = vsub.f32 %v1220, %v1221
    %v1223 = vand.u32 %v1222, 4294901760
    %1224 = vmatpush1.msra.mxu0 %v1223
    %1225 = vmatprep.subr.mxu0 0.0
    %v1226 = vand.u32 %v99, 4294901760
    %v1227 = vsub.f32 %v99, %v1226
    %v1228 = vand.u32 %v1227, 4294901760
    %v1229 = vsub.f32 %v1227, %v1228
    %v1230 = vand.u32 %v1229, 4294901760
    %1231 = vmatpush1.msra.mxu0 %v1230
    %1232 = vmatprep.subr.mxu0 0.0
    %v1233 = vand.u32 %v100, 4294901760
    %v1234 = vsub.f32 %v100, %v1233
    %v1235 = vand.u32 %v1234, 4294901760
    %v1236 = vsub.f32 %v1234, %v1235
    %v1237 = vand.u32 %v1236, 4294901760
    %1238 = vmatpush1.msra.mxu0 %v1237
    %1239 = vmatprep.subr.mxu0 0.0
    %v1240 = vand.u32 %v101, 4294901760
    %v1241 = vsub.f32 %v101, %v1240
    %v1242 = vand.u32 %v1241, 4294901760
    %v1243 = vsub.f32 %v1241, %v1242
    %v1244 = vand.u32 %v1243, 4294901760
    %1245 = vmatpush1.msra.mxu0 %v1244
    %1246 = vmatprep.subr.mxu0 0.0
    %v1247 = vand.u32 %v102, 4294901760
    %v1248 = vsub.f32 %v102, %v1247
    %v1249 = vand.u32 %v1248, 4294901760
    %v1250 = vsub.f32 %v1248, %v1249
    %v1251 = vand.u32 %v1250, 4294901760
    %1252 = vmatpush1.msra.mxu0 %v1251
    %1253 = vmatprep.subr.mxu0 0.0
    %v1254 = vand.u32 %v103, 4294901760
    %v1255 = vsub.f32 %v103, %v1254
    %v1256 = vand.u32 %v1255, 4294901760
    %v1257 = vsub.f32 %v1255, %v1256
    %v1258 = vand.u32 %v1257, 4294901760
    %1259 = vmatpush1.msra.mxu0 %v1258
    %1260 = vmatprep.subr.mxu0 0.0
    %v1261 = vand.u32 %v104, 4294901760
    %v1262 = vsub.f32 %v104, %v1261
    %v1263 = vand.u32 %v1262, 4294901760
    %v1264 = vsub.f32 %v1262, %v1263
    %v1265 = vand.u32 %v1264, 4294901760
    %1266 = vmatpush1.msra.mxu0 %v1265
    %1267 = vmatprep.subr.mxu0 0.0
    %v1268 = vand.u32 %v105, 4294901760
    %v1269 = vsub.f32 %v105, %v1268
    %v1270 = vand.u32 %v1269, 4294901760
    %v1271 = vsub.f32 %v1269, %v1270
    %v1272 = vand.u32 %v1271, 4294901760
    %1273 = vmatpush1.msra.mxu0 %v1272
    %1274 = vmatprep.subr.mxu0 0.0
    %v1275 = vand.u32 %v106, 4294901760
    %v1276 = vsub.f32 %v106, %v1275
    %v1277 = vand.u32 %v1276, 4294901760
    %v1278 = vsub.f32 %v1276, %v1277
    %v1279 = vand.u32 %v1278, 4294901760
    %1280 = vmatpush1.msra.mxu0 %v1279
    %1281 = vmatprep.subr.mxu0 0.0
    %v1282 = vand.u32 %v107, 4294901760
    %v1283 = vsub.f32 %v107, %v1282
    %v1284 = vand.u32 %v1283, 4294901760
    %v1285 = vsub.f32 %v1283, %v1284
    %v1286 = vand.u32 %v1285, 4294901760
    %1287 = vmatpush1.msra.mxu0 %v1286
    %1288 = vmatprep.subr.mxu0 0.0
    %v1289 = vand.u32 %v108, 4294901760
    %v1290 = vsub.f32 %v108, %v1289
    %v1291 = vand.u32 %v1290, 4294901760
    %v1292 = vsub.f32 %v1290, %v1291
    %v1293 = vand.u32 %v1292, 4294901760
    %1294 = vmatpush1.msra.mxu0 %v1293
    %1295 = vmatprep.subr.mxu0 0.0
    %v1296 = vand.u32 %v109, 4294901760
    %v1297 = vsub.f32 %v109, %v1296
    %v1298 = vand.u32 %v1297, 4294901760
    %v1299 = vsub.f32 %v1297, %v1298
    %v1300 = vand.u32 %v1299, 4294901760
    %1301 = vmatpush1.msra.mxu0 %v1300
    %1302 = vmatprep.subr.mxu0 0.0
    %v1303 = vand.u32 %v110, 4294901760
    %v1304 = vsub.f32 %v110, %v1303
    %v1305 = vand.u32 %v1304, 4294901760
    %v1306 = vsub.f32 %v1304, %v1305
    %v1307 = vand.u32 %v1306, 4294901760
    %1308 = vmatpush1.msra.mxu0 %v1307
    %1309 = vmatprep.subr.mxu0 0.0
    %v1310 = vand.u32 %v111, 4294901760
    %v1311 = vsub.f32 %v111, %v1310
    %v1312 = vand.u32 %v1311, 4294901760
    %v1313 = vsub.f32 %v1311, %v1312
    %v1314 = vand.u32 %v1313, 4294901760
    %1315 = vmatpush1.msra.mxu0 %v1314
    %v1316 = vand.u32 %v115, 4294901760
    %1317 = vmatprep.mubr.f32.mxu0 %v1316
    %v1318 = vand.u32 %v47, 4294901760
    %1319 = vmatmul.mubr.f32.gmra.mrb[0].mxu0 %v1318
    %v1320 = vpop.f32.mrb[0].mxu0
    %v1321 = vadd.f32 %v1089, %v1320
    %v1322 = vpop.f32.mrb[0].mxu0
    %1323 = vdwg.mxu0
    %1324 = vmatprep.subr.mxu0 0.0
    %v1325 = vand.u32 %v80, 4294901760
    %v1326 = vsub.f32 %v80, %v1325
    %1327 = vmatpush1.msra.mxu0 %v1326
    %1328 = vmatprep.subr.mxu0 0.0
    %v1329 = vand.u32 %v81, 4294901760
    %v1330 = vsub.f32 %v81, %v1329
    %1331 = vmatpush1.msra.mxu0 %v1330
    %1332 = vmatprep.subr.mxu0 0.0
    %v1333 = vand.u32 %v82, 4294901760
    %v1334 = vsub.f32 %v82, %v1333
    %1335 = vmatpush1.msra.mxu0 %v1334
    %1336 = vmatprep.subr.mxu0 0.0
    %v1337 = vand.u32 %v83, 4294901760
    %v1338 = vsub.f32 %v83, %v1337
    %1339 = vmatpush1.msra.mxu0 %v1338
    %1340 = vmatprep.subr.mxu0 0.0
    %v1341 = vand.u32 %v84, 4294901760
    %v1342 = vsub.f32 %v84, %v1341
    %1343 = vmatpush1.msra.mxu0 %v1342
    %1344 = vmatprep.subr.mxu0 0.0
    %v1345 = vand.u32 %v85, 4294901760
    %v1346 = vsub.f32 %v85, %v1345
    %1347 = vmatpush1.msra.mxu0 %v1346
    %1348 = vmatprep.subr.mxu0 0.0
    %v1349 = vand.u32 %v86, 4294901760
    %v1350 = vsub.f32 %v86, %v1349
    %1351 = vmatpush1.msra.mxu0 %v1350
    %1352 = vmatprep.subr.mxu0 0.0
    %v1353 = vand.u32 %v87, 4294901760
    %v1354 = vsub.f32 %v87, %v1353
    %1355 = vmatpush1.msra.mxu0 %v1354
    %1356 = vmatprep.subr.mxu0 0.0
    %v1357 = vand.u32 %v88, 4294901760
    %v1358 = vsub.f32 %v88, %v1357
    %1359 = vmatpush1.msra.mxu0 %v1358
    %1360 = vmatprep.subr.mxu0 0.0
    %v1361 = vand.u32 %v89, 4294901760
    %v1362 = vsub.f32 %v89, %v1361
    %1363 = vmatpush1.msra.mxu0 %v1362
    %1364 = vmatprep.subr.mxu0 0.0
    %v1365 = vand.u32 %v90, 4294901760
    %v1366 = vsub.f32 %v90, %v1365
    %1367 = vmatpush1.msra.mxu0 %v1366
    %1368 = vmatprep.subr.mxu0 0.0
    %v1369 = vand.u32 %v91, 4294901760
    %v1370 = vsub.f32 %v91, %v1369
    %1371 = vmatpush1.msra.mxu0 %v1370
    %1372 = vmatprep.subr.mxu0 0.0
    %v1373 = vand.u32 %v92, 4294901760
    %v1374 = vsub.f32 %v92, %v1373
    %1375 = vmatpush1.msra.mxu0 %v1374
    %1376 = vmatprep.subr.mxu0 0.0
    %v1377 = vand.u32 %v93, 4294901760
    %v1378 = vsub.f32 %v93, %v1377
    %1379 = vmatpush1.msra.mxu0 %v1378
    %1380 = vmatprep.subr.mxu0 0.0
    %v1381 = vand.u32 %v94, 4294901760
    %v1382 = vsub.f32 %v94, %v1381
    %1383 = vmatpush1.msra.mxu0 %v1382
    %1384 = vmatprep.subr.mxu0 0.0
    %v1385 = vand.u32 %v95, 4294901760
    %v1386 = vsub.f32 %v95, %v1385
    %1387 = vmatpush1.msra.mxu0 %v1386
    %1388 = vmatprep.subr.mxu0 0.0
    %v1389 = vand.u32 %v96, 4294901760
    %v1390 = vsub.f32 %v96, %v1389
    %1391 = vmatpush1.msra.mxu0 %v1390
    %1392 = vmatprep.subr.mxu0 0.0
    %v1393 = vand.u32 %v97, 4294901760
    %v1394 = vsub.f32 %v97, %v1393
    %1395 = vmatpush1.msra.mxu0 %v1394
    %1396 = vmatprep.subr.mxu0 0.0
    %v1397 = vand.u32 %v98, 4294901760
    %v1398 = vsub.f32 %v98, %v1397
    %1399 = vmatpush1.msra.mxu0 %v1398
    %1400 = vmatprep.subr.mxu0 0.0
    %v1401 = vand.u32 %v99, 4294901760
    %v1402 = vsub.f32 %v99, %v1401
    %1403 = vmatpush1.msra.mxu0 %v1402
    %1404 = vmatprep.subr.mxu0 0.0
    %v1405 = vand.u32 %v100, 4294901760
    %v1406 = vsub.f32 %v100, %v1405
    %1407 = vmatpush1.msra.mxu0 %v1406
    %1408 = vmatprep.subr.mxu0 0.0
    %v1409 = vand.u32 %v101, 4294901760
    %v1410 = vsub.f32 %v101, %v1409
    %1411 = vmatpush1.msra.mxu0 %v1410
    %1412 = vmatprep.subr.mxu0 0.0
    %v1413 = vand.u32 %v102, 4294901760
    %v1414 = vsub.f32 %v102, %v1413
    %1415 = vmatpush1.msra.mxu0 %v1414
    %1416 = vmatprep.subr.mxu0 0.0
    %v1417 = vand.u32 %v103, 4294901760
    %v1418 = vsub.f32 %v103, %v1417
    %1419 = vmatpush1.msra.mxu0 %v1418
    %1420 = vmatprep.subr.mxu0 0.0
    %v1421 = vand.u32 %v104, 4294901760
    %v1422 = vsub.f32 %v104, %v1421
    %1423 = vmatpush1.msra.mxu0 %v1422
    %1424 = vmatprep.subr.mxu0 0.0
    %v1425 = vand.u32 %v105, 4294901760
    %v1426 = vsub.f32 %v105, %v1425
    %1427 = vmatpush1.msra.mxu0 %v1426
    %1428 = vmatprep.subr.mxu0 0.0
    %v1429 = vand.u32 %v106, 4294901760
    %v1430 = vsub.f32 %v106, %v1429
    %1431 = vmatpush1.msra.mxu0 %v1430
    %1432 = vmatprep.subr.mxu0 0.0
    %v1433 = vand.u32 %v107, 4294901760
    %v1434 = vsub.f32 %v107, %v1433
    %1435 = vmatpush1.msra.mxu0 %v1434
    %1436 = vmatprep.subr.mxu0 0.0
    %v1437 = vand.u32 %v108, 4294901760
    %v1438 = vsub.f32 %v108, %v1437
    %1439 = vmatpush1.msra.mxu0 %v1438
    %1440 = vmatprep.subr.mxu0 0.0
    %v1441 = vand.u32 %v109, 4294901760
    %v1442 = vsub.f32 %v109, %v1441
    %1443 = vmatpush1.msra.mxu0 %v1442
    %1444 = vmatprep.subr.mxu0 0.0
    %v1445 = vand.u32 %v110, 4294901760
    %v1446 = vsub.f32 %v110, %v1445
    %1447 = vmatpush1.msra.mxu0 %v1446
    %1448 = vmatprep.subr.mxu0 0.0
    %v1449 = vand.u32 %v111, 4294901760
    %v1450 = vsub.f32 %v111, %v1449
    %1451 = vmatpush1.msra.mxu0 %v1450
    %v1452 = vand.u32 %v115, 4294901760
    %v1453 = vsub.f32 %v115, %v1452
    %1454 = vmatprep.mubr.f32.mxu0 %v1453
    %v1455 = vand.u32 %v47, 4294901760
    %v1456 = vsub.f32 %v47, %v1455
    %1457 = vmatmul.mubr.f32.gmra.mrb[0].mxu0 %v1456
    %v1458 = vpop.f32.mrb[0].mxu0
    %v1459 = vadd.f32 %v1321, %v1458
    %v1460 = vpop.f32.mrb[0].mxu0
    %1461 = vdwg.mxu0
    %1462 = vmatprep.subr.mxu0 0.0
    %v1463 = vand.u32 %v80, 4294901760
    %1464 = vmatpush1.msra.mxu0 %v1463
    %1465 = vmatprep.subr.mxu0 0.0
    %v1466 = vand.u32 %v81, 4294901760
    %1467 = vmatpush1.msra.mxu0 %v1466
    %1468 = vmatprep.subr.mxu0 0.0
    %v1469 = vand.u32 %v82, 4294901760
    %1470 = vmatpush1.msra.mxu0 %v1469
    %1471 = vmatprep.subr.mxu0 0.0
    %v1472 = vand.u32 %v83, 4294901760
    %1473 = vmatpush1.msra.mxu0 %v1472
    %1474 = vmatprep.subr.mxu0 0.0
    %v1475 = vand.u32 %v84, 4294901760
    %1476 = vmatpush1.msra.mxu0 %v1475
    %1477 = vmatprep.subr.mxu0 0.0
    %v1478 = vand.u32 %v85, 4294901760
    %1479 = vmatpush1.msra.mxu0 %v1478
    %1480 = vmatprep.subr.mxu0 0.0
    %v1481 = vand.u32 %v86, 4294901760
    %1482 = vmatpush1.msra.mxu0 %v1481
    %1483 = vmatprep.subr.mxu0 0.0
    %v1484 = vand.u32 %v87, 4294901760
    %1485 = vmatpush1.msra.mxu0 %v1484
    %1486 = vmatprep.subr.mxu0 0.0
    %v1487 = vand.u32 %v88, 4294901760
    %1488 = vmatpush1.msra.mxu0 %v1487
    %1489 = vmatprep.subr.mxu0 0.0
    %v1490 = vand.u32 %v89, 4294901760
    %1491 = vmatpush1.msra.mxu0 %v1490
    %1492 = vmatprep.subr.mxu0 0.0
    %v1493 = vand.u32 %v90, 4294901760
    %1494 = vmatpush1.msra.mxu0 %v1493
    %1495 = vmatprep.subr.mxu0 0.0
    %v1496 = vand.u32 %v91, 4294901760
    %1497 = vmatpush1.msra.mxu0 %v1496
    %1498 = vmatprep.subr.mxu0 0.0
    %v1499 = vand.u32 %v92, 4294901760
    %1500 = vmatpush1.msra.mxu0 %v1499
    %1501 = vmatprep.subr.mxu0 0.0
    %v1502 = vand.u32 %v93, 4294901760
    %1503 = vmatpush1.msra.mxu0 %v1502
    %1504 = vmatprep.subr.mxu0 0.0
    %v1505 = vand.u32 %v94, 4294901760
    %1506 = vmatpush1.msra.mxu0 %v1505
    %1507 = vmatprep.subr.mxu0 0.0
    %v1508 = vand.u32 %v95, 4294901760
    %1509 = vmatpush1.msra.mxu0 %v1508
    %1510 = vmatprep.subr.mxu0 0.0
    %v1511 = vand.u32 %v96, 4294901760
    %1512 = vmatpush1.msra.mxu0 %v1511
    %1513 = vmatprep.subr.mxu0 0.0
    %v1514 = vand.u32 %v97, 4294901760
    %1515 = vmatpush1.msra.mxu0 %v1514
    %1516 = vmatprep.subr.mxu0 0.0
    %v1517 = vand.u32 %v98, 4294901760
    %1518 = vmatpush1.msra.mxu0 %v1517
    %1519 = vmatprep.subr.mxu0 0.0
    %v1520 = vand.u32 %v99, 4294901760
    %1521 = vmatpush1.msra.mxu0 %v1520
    %1522 = vmatprep.subr.mxu0 0.0
    %v1523 = vand.u32 %v100, 4294901760
    %1524 = vmatpush1.msra.mxu0 %v1523
    %1525 = vmatprep.subr.mxu0 0.0
    %v1526 = vand.u32 %v101, 4294901760
    %1527 = vmatpush1.msra.mxu0 %v1526
    %1528 = vmatprep.subr.mxu0 0.0
    %v1529 = vand.u32 %v102, 4294901760
    %1530 = vmatpush1.msra.mxu0 %v1529
    %1531 = vmatprep.subr.mxu0 0.0
    %v1532 = vand.u32 %v103, 4294901760
    %1533 = vmatpush1.msra.mxu0 %v1532
    %1534 = vmatprep.subr.mxu0 0.0
    %v1535 = vand.u32 %v104, 4294901760
    %1536 = vmatpush1.msra.mxu0 %v1535
    %1537 = vmatprep.subr.mxu0 0.0
    %v1538 = vand.u32 %v105, 4294901760
    %1539 = vmatpush1.msra.mxu0 %v1538
    %1540 = vmatprep.subr.mxu0 0.0
    %v1541 = vand.u32 %v106, 4294901760
    %1542 = vmatpush1.msra.mxu0 %v1541
    %1543 = vmatprep.subr.mxu0 0.0
    %v1544 = vand.u32 %v107, 4294901760
    %1545 = vmatpush1.msra.mxu0 %v1544
    %1546 = vmatprep.subr.mxu0 0.0
    %v1547 = vand.u32 %v108, 4294901760
    %1548 = vmatpush1.msra.mxu0 %v1547
    %1549 = vmatprep.subr.mxu0 0.0
    %v1550 = vand.u32 %v109, 4294901760
    %1551 = vmatpush1.msra.mxu0 %v1550
    %1552 = vmatprep.subr.mxu0 0.0
    %v1553 = vand.u32 %v110, 4294901760
    %1554 = vmatpush1.msra.mxu0 %v1553
    %1555 = vmatprep.subr.mxu0 0.0
    %v1556 = vand.u32 %v111, 4294901760
    %1557 = vmatpush1.msra.mxu0 %v1556
    %v1558 = vand.u32 %v115, 4294901760
    %v1559 = vsub.f32 %v115, %v1558
    %v1560 = vand.u32 %v1559, 4294901760
    %1561 = vmatprep.mubr.f32.mxu0 %v1560
    %v1562 = vand.u32 %v47, 4294901760
    %v1563 = vsub.f32 %v47, %v1562
    %v1564 = vand.u32 %v1563, 4294901760
    %1565 = vmatmul.mubr.f32.gmra.mrb[0].mxu0 %v1564
    %v1566 = vpop.f32.mrb[0].mxu0
    %v1567 = vadd.f32 %v1459, %v1566
    %v1568 = vpop.f32.mrb[0].mxu0
    %1569 = vdwg.mxu0
    %1570 = vmatprep.subr.mxu0 0.0
    %v1571 = vand.u32 %v80, 4294901760
    %v1572 = vsub.f32 %v80, %v1571
    %v1573 = vand.u32 %v1572, 4294901760
    %1574 = vmatpush1.msra.mxu0 %v1573
    %1575 = vmatprep.subr.mxu0 0.0
    %v1576 = vand.u32 %v81, 4294901760
    %v1577 = vsub.f32 %v81, %v1576
    %v1578 = vand.u32 %v1577, 4294901760
    %1579 = vmatpush1.msra.mxu0 %v1578
    %1580 = vmatprep.subr.mxu0 0.0
    %v1581 = vand.u32 %v82, 4294901760
    %v1582 = vsub.f32 %v82, %v1581
    %v1583 = vand.u32 %v1582, 4294901760
    %1584 = vmatpush1.msra.mxu0 %v1583
    %1585 = vmatprep.subr.mxu0 0.0
    %v1586 = vand.u32 %v83, 4294901760
    %v1587 = vsub.f32 %v83, %v1586
    %v1588 = vand.u32 %v1587, 4294901760
    %1589 = vmatpush1.msra.mxu0 %v1588
    %1590 = vmatprep.subr.mxu0 0.0
    %v1591 = vand.u32 %v84, 4294901760
    %v1592 = vsub.f32 %v84, %v1591
    %v1593 = vand.u32 %v1592, 4294901760
    %1594 = vmatpush1.msra.mxu0 %v1593
    %1595 = vmatprep.subr.mxu0 0.0
    %v1596 = vand.u32 %v85, 4294901760
    %v1597 = vsub.f32 %v85, %v1596
    %v1598 = vand.u32 %v1597, 4294901760
    %1599 = vmatpush1.msra.mxu0 %v1598
    %1600 = vmatprep.subr.mxu0 0.0
    %v1601 = vand.u32 %v86, 4294901760
    %v1602 = vsub.f32 %v86, %v1601
    %v1603 = vand.u32 %v1602, 4294901760
    %1604 = vmatpush1.msra.mxu0 %v1603
    %1605 = vmatprep.subr.mxu0 0.0
    %v1606 = vand.u32 %v87, 4294901760
    %v1607 = vsub.f32 %v87, %v1606
    %v1608 = vand.u32 %v1607, 4294901760
    %1609 = vmatpush1.msra.mxu0 %v1608
    %1610 = vmatprep.subr.mxu0 0.0
    %v1611 = vand.u32 %v88, 4294901760
    %v1612 = vsub.f32 %v88, %v1611
    %v1613 = vand.u32 %v1612, 4294901760
    %1614 = vmatpush1.msra.mxu0 %v1613
    %1615 = vmatprep.subr.mxu0 0.0
    %v1616 = vand.u32 %v89, 4294901760
    %v1617 = vsub.f32 %v89, %v1616
    %v1618 = vand.u32 %v1617, 4294901760
    %1619 = vmatpush1.msra.mxu0 %v1618
    %1620 = vmatprep.subr.mxu0 0.0
    %v1621 = vand.u32 %v90, 4294901760
    %v1622 = vsub.f32 %v90, %v1621
    %v1623 = vand.u32 %v1622, 4294901760
    %1624 = vmatpush1.msra.mxu0 %v1623
    %1625 = vmatprep.subr.mxu0 0.0
    %v1626 = vand.u32 %v91, 4294901760
    %v1627 = vsub.f32 %v91, %v1626
    %v1628 = vand.u32 %v1627, 4294901760
    %1629 = vmatpush1.msra.mxu0 %v1628
    %1630 = vmatprep.subr.mxu0 0.0
    %v1631 = vand.u32 %v92, 4294901760
    %v1632 = vsub.f32 %v92, %v1631
    %v1633 = vand.u32 %v1632, 4294901760
    %1634 = vmatpush1.msra.mxu0 %v1633
    %1635 = vmatprep.subr.mxu0 0.0
    %v1636 = vand.u32 %v93, 4294901760
    %v1637 = vsub.f32 %v93, %v1636
    %v1638 = vand.u32 %v1637, 4294901760
    %1639 = vmatpush1.msra.mxu0 %v1638
    %1640 = vmatprep.subr.mxu0 0.0
    %v1641 = vand.u32 %v94, 4294901760
    %v1642 = vsub.f32 %v94, %v1641
    %v1643 = vand.u32 %v1642, 4294901760
    %1644 = vmatpush1.msra.mxu0 %v1643
    %1645 = vmatprep.subr.mxu0 0.0
    %v1646 = vand.u32 %v95, 4294901760
    %v1647 = vsub.f32 %v95, %v1646
    %v1648 = vand.u32 %v1647, 4294901760
    %1649 = vmatpush1.msra.mxu0 %v1648
    %1650 = vmatprep.subr.mxu0 0.0
    %v1651 = vand.u32 %v96, 4294901760
    %v1652 = vsub.f32 %v96, %v1651
    %v1653 = vand.u32 %v1652, 4294901760
    %1654 = vmatpush1.msra.mxu0 %v1653
    %1655 = vmatprep.subr.mxu0 0.0
    %v1656 = vand.u32 %v97, 4294901760
    %v1657 = vsub.f32 %v97, %v1656
    %v1658 = vand.u32 %v1657, 4294901760
    %1659 = vmatpush1.msra.mxu0 %v1658
    %1660 = vmatprep.subr.mxu0 0.0
    %v1661 = vand.u32 %v98, 4294901760
    %v1662 = vsub.f32 %v98, %v1661
    %v1663 = vand.u32 %v1662, 4294901760
    %1664 = vmatpush1.msra.mxu0 %v1663
    %1665 = vmatprep.subr.mxu0 0.0
    %v1666 = vand.u32 %v99, 4294901760
    %v1667 = vsub.f32 %v99, %v1666
    %v1668 = vand.u32 %v1667, 4294901760
    %1669 = vmatpush1.msra.mxu0 %v1668
    %1670 = vmatprep.subr.mxu0 0.0
    %v1671 = vand.u32 %v100, 4294901760
    %v1672 = vsub.f32 %v100, %v1671
    %v1673 = vand.u32 %v1672, 4294901760
    %1674 = vmatpush1.msra.mxu0 %v1673
    %1675 = vmatprep.subr.mxu0 0.0
    %v1676 = vand.u32 %v101, 4294901760
    %v1677 = vsub.f32 %v101, %v1676
    %v1678 = vand.u32 %v1677, 4294901760
    %1679 = vmatpush1.msra.mxu0 %v1678
    %1680 = vmatprep.subr.mxu0 0.0
    %v1681 = vand.u32 %v102, 4294901760
    %v1682 = vsub.f32 %v102, %v1681
    %v1683 = vand.u32 %v1682, 4294901760
    %1684 = vmatpush1.msra.mxu0 %v1683
    %1685 = vmatprep.subr.mxu0 0.0
    %v1686 = vand.u32 %v103, 4294901760
    %v1687 = vsub.f32 %v103, %v1686
    %v1688 = vand.u32 %v1687, 4294901760
    %1689 = vmatpush1.msra.mxu0 %v1688
    %1690 = vmatprep.subr.mxu0 0.0
    %v1691 = vand.u32 %v104, 4294901760
    %v1692 = vsub.f32 %v104, %v1691
    %v1693 = vand.u32 %v1692, 4294901760
    %1694 = vmatpush1.msra.mxu0 %v1693
    %1695 = vmatprep.subr.mxu0 0.0
    %v1696 = vand.u32 %v105, 4294901760
    %v1697 = vsub.f32 %v105, %v1696
    %v1698 = vand.u32 %v1697, 4294901760
    %1699 = vmatpush1.msra.mxu0 %v1698
    %1700 = vmatprep.subr.mxu0 0.0
    %v1701 = vand.u32 %v106, 4294901760
    %v1702 = vsub.f32 %v106, %v1701
    %v1703 = vand.u32 %v1702, 4294901760
    %1704 = vmatpush1.msra.mxu0 %v1703
    %1705 = vmatprep.subr.mxu0 0.0
    %v1706 = vand.u32 %v107, 4294901760
    %v1707 = vsub.f32 %v107, %v1706
    %v1708 = vand.u32 %v1707, 4294901760
    %1709 = vmatpush1.msra.mxu0 %v1708
    %1710 = vmatprep.subr.mxu0 0.0
    %v1711 = vand.u32 %v108, 4294901760
    %v1712 = vsub.f32 %v108, %v1711
    %v1713 = vand.u32 %v1712, 4294901760
    %1714 = vmatpush1.msra.mxu0 %v1713
    %1715 = vmatprep.subr.mxu0 0.0
    %v1716 = vand.u32 %v109, 4294901760
    %v1717 = vsub.f32 %v109, %v1716
    %v1718 = vand.u32 %v1717, 4294901760
    %1719 = vmatpush1.msra.mxu0 %v1718
    %1720 = vmatprep.subr.mxu0 0.0
    %v1721 = vand.u32 %v110, 4294901760
    %v1722 = vsub.f32 %v110, %v1721
    %v1723 = vand.u32 %v1722, 4294901760
    %1724 = vmatpush1.msra.mxu0 %v1723
    %1725 = vmatprep.subr.mxu0 0.0
    %v1726 = vand.u32 %v111, 4294901760
    %v1727 = vsub.f32 %v111, %v1726
    %v1728 = vand.u32 %v1727, 4294901760
    %1729 = vmatpush1.msra.mxu0 %v1728
    %v1730 = vand.u32 %v115, 4294901760
    %1731 = vmatprep.mubr.f32.mxu0 %v1730
    %v1732 = vand.u32 %v47, 4294901760
    %1733 = vmatmul.mubr.f32.gmra.mrb[0].mxu0 %v1732
    %v1734 = vpop.f32.mrb[0].mxu0
    %v1735 = vadd.f32 %v1567, %v1734
    %v1736 = vpop.f32.mrb[0].mxu0
    %1737 = vdwg.mxu0
    %1738 = vmatprep.subr.mxu0 0.0
    %v1739 = vand.u32 %v80, 4294901760
    %1740 = vmatpush1.msra.mxu0 %v1739
    %1741 = vmatprep.subr.mxu0 0.0
    %v1742 = vand.u32 %v81, 4294901760
    %1743 = vmatpush1.msra.mxu0 %v1742
    %1744 = vmatprep.subr.mxu0 0.0
    %v1745 = vand.u32 %v82, 4294901760
    %1746 = vmatpush1.msra.mxu0 %v1745
    %1747 = vmatprep.subr.mxu0 0.0
    %v1748 = vand.u32 %v83, 4294901760
    %1749 = vmatpush1.msra.mxu0 %v1748
    %1750 = vmatprep.subr.mxu0 0.0
    %v1751 = vand.u32 %v84, 4294901760
    %1752 = vmatpush1.msra.mxu0 %v1751
    %1753 = vmatprep.subr.mxu0 0.0
    %v1754 = vand.u32 %v85, 4294901760
    %1755 = vmatpush1.msra.mxu0 %v1754
    %1756 = vmatprep.subr.mxu0 0.0
    %v1757 = vand.u32 %v86, 4294901760
    %1758 = vmatpush1.msra.mxu0 %v1757
    %1759 = vmatprep.subr.mxu0 0.0
    %v1760 = vand.u32 %v87, 4294901760
    %1761 = vmatpush1.msra.mxu0 %v1760
    %1762 = vmatprep.subr.mxu0 0.0
    %v1763 = vand.u32 %v88, 4294901760
    %1764 = vmatpush1.msra.mxu0 %v1763
    %1765 = vmatprep.subr.mxu0 0.0
    %v1766 = vand.u32 %v89, 4294901760
    %1767 = vmatpush1.msra.mxu0 %v1766
    %1768 = vmatprep.subr.mxu0 0.0
    %v1769 = vand.u32 %v90, 4294901760
    %1770 = vmatpush1.msra.mxu0 %v1769
    %1771 = vmatprep.subr.mxu0 0.0
    %v1772 = vand.u32 %v91, 4294901760
    %1773 = vmatpush1.msra.mxu0 %v1772
    %1774 = vmatprep.subr.mxu0 0.0
    %v1775 = vand.u32 %v92, 4294901760
    %1776 = vmatpush1.msra.mxu0 %v1775
    %1777 = vmatprep.subr.mxu0 0.0
    %v1778 = vand.u32 %v93, 4294901760
    %1779 = vmatpush1.msra.mxu0 %v1778
    %1780 = vmatprep.subr.mxu0 0.0
    %v1781 = vand.u32 %v94, 4294901760
    %1782 = vmatpush1.msra.mxu0 %v1781
    %1783 = vmatprep.subr.mxu0 0.0
    %v1784 = vand.u32 %v95, 4294901760
    %1785 = vmatpush1.msra.mxu0 %v1784
    %1786 = vmatprep.subr.mxu0 0.0
    %v1787 = vand.u32 %v96, 4294901760
    %1788 = vmatpush1.msra.mxu0 %v1787
    %1789 = vmatprep.subr.mxu0 0.0
    %v1790 = vand.u32 %v97, 4294901760
    %1791 = vmatpush1.msra.mxu0 %v1790
    %1792 = vmatprep.subr.mxu0 0.0
    %v1793 = vand.u32 %v98, 4294901760
    %1794 = vmatpush1.msra.mxu0 %v1793
    %1795 = vmatprep.subr.mxu0 0.0
    %v1796 = vand.u32 %v99, 4294901760
    %1797 = vmatpush1.msra.mxu0 %v1796
    %1798 = vmatprep.subr.mxu0 0.0
    %v1799 = vand.u32 %v100, 4294901760
    %1800 = vmatpush1.msra.mxu0 %v1799
    %1801 = vmatprep.subr.mxu0 0.0
    %v1802 = vand.u32 %v101, 4294901760
    %1803 = vmatpush1.msra.mxu0 %v1802
    %1804 = vmatprep.subr.mxu0 0.0
    %v1805 = vand.u32 %v102, 4294901760
    %1806 = vmatpush1.msra.mxu0 %v1805
    %1807 = vmatprep.subr.mxu0 0.0
    %v1808 = vand.u32 %v103, 4294901760
    %1809 = vmatpush1.msra.mxu0 %v1808
    %1810 = vmatprep.subr.mxu0 0.0
    %v1811 = vand.u32 %v104, 4294901760
    %1812 = vmatpush1.msra.mxu0 %v1811
    %1813 = vmatprep.subr.mxu0 0.0
    %v1814 = vand.u32 %v105, 4294901760
    %1815 = vmatpush1.msra.mxu0 %v1814
    %1816 = vmatprep.subr.mxu0 0.0
    %v1817 = vand.u32 %v106, 4294901760
    %1818 = vmatpush1.msra.mxu0 %v1817
    %1819 = vmatprep.subr.mxu0 0.0
    %v1820 = vand.u32 %v107, 4294901760
    %1821 = vmatpush1.msra.mxu0 %v1820
    %1822 = vmatprep.subr.mxu0 0.0
    %v1823 = vand.u32 %v108, 4294901760
    %1824 = vmatpush1.msra.mxu0 %v1823
    %1825 = vmatprep.subr.mxu0 0.0
    %v1826 = vand.u32 %v109, 4294901760
    %1827 = vmatpush1.msra.mxu0 %v1826
    %1828 = vmatprep.subr.mxu0 0.0
    %v1829 = vand.u32 %v110, 4294901760
    %1830 = vmatpush1.msra.mxu0 %v1829
    %1831 = vmatprep.subr.mxu0 0.0
    %v1832 = vand.u32 %v111, 4294901760
    %1833 = vmatpush1.msra.mxu0 %v1832
    %v1834 = vand.u32 %v115, 4294901760
    %1835 = vmatprep.mubr.f32.mxu0 %v1834
    %v1836 = vand.u32 %v47, 4294901760
    %1837 = vmatmul.mubr.f32.gmra.mrb[0].mxu0 %v1836
    %v1838 = vpop.f32.mrb[0].mxu0
    %v1839 = vadd.f32 %v1735, %v1838
    %v1840 = vpop.f32.mrb[0].mxu0
    %1841 = vdwg.mxu0
    %v1842 = vlog2.pop %v1839
    %v1843 = vmul.f32 %v1842, 0.6931472
    %v1844 = vmul.f32 %v1843, 0.33333334
    %v1845 = vmul.f32 %v1844, 1.442695
    %v1846 = vpow.pop %v1845
    %1847 = vst [vmem:[#allocation9] sm:$0xf] %v1846
    // Predicated region
    $region18: #{tpu_custom_call.1} parent=1 // pred_check
      _
    $region19: #{tpu_custom_call.1} parent=1 // pred_check_branch
      %1849 = sbr.rel (0) target = $region21
    $region20: #{tpu_custom_call.1} parent=1 // pred_region
      %s1851 = ssub.s32 64, 64
      %1852 = vsyncadd [#allocation6], %s1851
      %s1854 = sshll.u32 [#allocation9], 4
      %s1855 = int_to_ptr.vmem [resolvable:$true] %s1854
      %1857 = dma.vmem_to_hbm [thread:$0]  %s1855, 64, %s3, [#allocation6]
    $region21: #{tpu_custom_call.1} parent=1 // pred_fallthru
      _
    // Predicated region
    $region22: #{tpu_custom_call.1} parent=1 // pred_check
      _
    $region23: #{tpu_custom_call.1} parent=1 // pred_check_branch
      %1859 = sbr.rel (0) target = $region25
    $region24: #{tpu_custom_call.1} parent=1 // pred_region
      %1860 = dma.done [#allocation6], 64
    $region25: #{tpu_custom_call.1} parent=1 // pred_fallthru
      _
    %1861 = vsyncpa [#allocation5], 1
    %1862 = vsyncpa [#allocation8], 1
    %1863 = vsyncpa [#allocation6], 1

</llo_original>
